<compile_context>
chip_gen: v7x
topology: tpu7x:2x2x1
jax: 0.10.0
libtpu: 0.0.40
codegen_flags: <defaults>
</compile_context>

<pallas_src>
import functools

import jax
import jax.numpy as jnp
from jax.experimental import pallas as pl
from jax.experimental.pallas import tpu as pltpu


def _round_up(x, m):
    return (x + m - 1) // m * m


def _vmem_budget_bytes():
    """Generation-aware VMEM budget (leave ~25% headroom for Pallas internals)."""
    cap = 64 * 1024 * 1024  # conservative fallback (safe on every generation)
    try:
        info = pltpu.get_tpu_info()
        cap = int(getattr(info, "vmem_capacity_bytes", cap))
    except Exception:
        pass
    # v5e/v6e (128 MiB) -> 96 MiB ; v7x (64 MiB) -> 48 MiB
    return min(cap * 3 // 4, 100 * 1024 * 1024)


def _choose_config(n, dip, dhp, dop, budget):
    """Pick the largest adjacency tile that fits, and whether the whole padded
    adjacency can stay VMEM-resident (single HBM pass instead of two)."""
    n128 = _round_up(n, 128)
    dmax = max(dhp, dop)
    candidates = sorted({min(b, n128) for b in (512, 256, 128)}, reverse=True)
    for block in candidates:
        np_ = _round_up(n, block)
        # conservative: assume every BlockSpec input gets the default 2 buffers
        fixed = (2 * np_ * dip * 2                    # X (VMEM-resident, bf16)
                 + 2 * (dip * dhp + dhp * dop) * 2    # W1, W2 (bf16)
                 + 2 * (dhp + dop) * 4                # b1, b2 (f32)
                 + 2 * block * dop * 4                # output row-tile block (f32)
                 + np_ * (dmax + dhp) * 2             # aliased s1/s2 + h scratch (bf16)
                 + block * (dhp + dop) * 4)           # acc1 + acc2 (f32)
        streaming = fixed + 2 * block * block * 2     # A streamed as (block, block) bf16 tiles
        if streaming <= budget:
            adj_resident = (fixed + 2 * np_ * np_ * 2) <= budget
            return block, adj_resident
    return candidates[-1], False


def _make_kernel(tm, tk, adj_resident):
    def kernel(adj_ref, x_ref, w1_ref, b1_ref, w2_ref, b2_ref,
               out_ref, s_ref, h_ref, acc1_ref, acc2_ref):
        p = pl.program_id(0)      # 0: layer-1 phase (h), 1: layer-2 phase (logits)
        i = pl.program_id(1)      # adjacency row tile (output rows)
        k = pl.program_id(2)      # contraction (adjacency column / node) tile
        nk = pl.num_programs(2)

        dhp = h_ref.shape[1]      # padded hidden dim
        dop = out_ref.shape[1]    # padded output dim

        roff = pl.multiple_of(i * tm, tm)
        koff = pl.multiple_of(k * tk, tk)

        if adj_resident:
            # whole padded A lives in VMEM: slice the current (tm, tk) tile
            a_tile = adj_ref[pl.ds(roff, tm), pl.ds(koff, tk)]
        else:
            # A streamed as (tm, tk) tiles (double-buffered by BlockSpec)
            a_tile = adj_ref[...]

        # ---- lazily build the support matrices, one k-block per step of the
        # first row sweep (i == 0) of each phase. s_ref aliases s1 (phase 0)
        # and s2 (phase 1): their lifetimes are disjoint.
        @pl.when((p == 0) & (i == 0))
        def _():
            s1_blk = jnp.dot(x_ref[pl.ds(koff, tk), :], w1_ref[...],
                             preferred_element_type=jnp.float32)
            s_ref[pl.ds(koff, tk), :dhp] = s1_blk.astype(s_ref.dtype)

        @pl.when((p == 1) & (i == 0))
        def _():
            # h was fully written during phase 0 (grid is sequential/arbitrary)
            s2_blk = jnp.dot(h_ref[pl.ds(koff, tk), :], w2_ref[...],
                             preferred_element_type=jnp.float32)
            s_ref[pl.ds(koff, tk), :dop] = s2_blk.astype(s_ref.dtype)

        # ---- phase 0: h[rows i] = relu(A[rows i, :] @ s1 + b1) -------------
        @pl.when((p == 0) & (k == 0))
        def _():
            acc1_ref[...] = jnp.zeros_like(acc1_ref)

        @pl.when(p == 0)
        def _():
            acc1_ref[...] += jnp.dot(a_tile, s_ref[pl.ds(koff, tk), :dhp],
                                     preferred_element_type=jnp.float32)

        @pl.when((p == 0) & (k == nk - 1))
        def _():
            # Padded h rows equal relu(b1) != 0; that is harmless because the
            # padded adjacency COLUMNS are exactly zero, so phase 1 never mixes
            # them into real rows (and the wrapper slices [:n] at the end).
            h_rows = jnp.maximum(acc1_ref[...] + b1_ref[...], 0.0)
            h_ref[pl.ds(roff, tm), :] = h_rows.astype(h_ref.dtype)

        # ---- phase 1: out[rows i] = A[rows i, :] @ s2 + b2 -----------------
        @pl.when((p == 1) & (k == 0))
        def _():
            acc2_ref[...] = jnp.zeros_like(acc2_ref)

        @pl.when(p == 1)
        def _():
            acc2_ref[...] += jnp.dot(a_tile, s_ref[pl.ds(koff, tk), :dop],
                                     preferred_element_type=jnp.float32)

        @pl.when((p == 1) & (k == nk - 1))
        def _():
            out_ref[...] = (acc2_ref[...] + b2_ref[...]).astype(out_ref.dtype)

    return kernel


def pad_gcn_inputs(params, adjacency, x, *, block):
    """Zero-pad nodes to `block` and feature dims to 128 (lane-dense), cast
    matmul operands to bf16. Hoist this out of the hot path when the graph is
    reused across calls (this pad+cast is itself HBM traffic ~ O(N^2))."""
    n, d_in = x.shape
    d_h = params["w1"].shape[1]
    d_out = params["w2"].shape[1]

    np_ = _round_up(n, block)
    dip = _round_up(d_in, 128)
    dhp = _round_up(d_h, 128)
    dop = _round_up(d_out, 128)

    bf = jnp.bfloat16
    adj_p = jnp.zeros((np_, np_), bf).at[:n, :n].set(adjacency.astype(bf))
    x_p = jnp.zeros((np_, dip), bf).at[:n, :d_in].set(x.astype(bf))
    w1_p = jnp.zeros((dip, dhp), bf).at[:d_in, :d_h].set(params["w1"].astype(bf))
    b1_p = jnp.zeros((1, dhp), jnp.float32).at[0, :d_h].set(params["b1"].astype(jnp.float32))
    w2_p = jnp.zeros((dhp, dop), bf).at[:d_h, :d_out].set(params["w2"].astype(bf))
    b2_p = jnp.zeros((1, dop), jnp.float32).at[0, :d_out].set(params["b2"].astype(jnp.float32))
    return adj_p, x_p, w1_p, b1_p, w2_p, b2_p


@functools.partial(
    jax.jit,
    static_argnames=("n", "d_out", "block", "adj_resident", "vmem_limit_bytes"))
def gcn_forward_padded(adj_p, x_p, w1_p, b1_p, w2_p, b2_p, *,
                       n, d_out, block, adj_resident, vmem_limit_bytes):
    np_, dip = x_p.shape
    dhp = w1_p.shape[1]
    dop = w2_p.shape[1]
    tm = tk = block
    assert np_ % tm == 0 and np_ % tk == 0
    grid = (2, np_ // tm, np_ // tk)

    if adj_resident:
        # one HBM pass over A; kept resident across both phases
        adj_spec = pl.BlockSpec((np_, np_), lambda p, i, k: (0, 0))
    else:
        # fallback: stream A as (tm, tk) tiles (double-buffered), twice
        adj_spec = pl.BlockSpec((tm, tk), lambda p, i, k: (i, k))

    out = pl.pallas_call(
        _make_kernel(tm, tk, adj_resident),
        out_shape=jax.ShapeDtypeStruct((np_, dop), jnp.float32),
        grid_spec=pltpu.PrefetchScalarGridSpec(
            num_scalar_prefetch=0,
            grid=grid,
            in_specs=[
                adj_spec,
                # small operands stay VMEM-resident across the whole grid
                pl.BlockSpec((np_, dip), lambda p, i, k: (0, 0)),   # X
                pl.BlockSpec((dip, dhp), lambda p, i, k: (0, 0)),   # W1
                pl.BlockSpec((1, dhp), lambda p, i, k: (0, 0)),     # b1
                pl.BlockSpec((dhp, dop), lambda p, i, k: (0, 0)),   # W2
                pl.BlockSpec((1, dop), lambda p, i, k: (0, 0)),     # b2
            ],
            # Output block index is 0 for all of phase 0 (never stored there)
            # and becomes the row tile i in phase 1. Each block index therefore
            # appears in exactly one contiguous run of grid steps and is always
            # written (at k == nk-1 of phase 1) before that run ends, so every
            # writeback carries valid data -- same contract as a reduction-axis
            # accumulator.
            out_specs=pl.BlockSpec((tm, dop), lambda p, i, k: (i * p, 0)),
            scratch_shapes=[
                pltpu.VMEM((np_, max(dhp, dop)), jnp.bfloat16),  # aliased s1/s2
                pltpu.VMEM((np_, dhp), jnp.bfloat16),            # h = relu(A@s1+b1)
                pltpu.VMEM((tm, dhp), jnp.float32),              # layer-1 row-tile acc
                pltpu.VMEM((tm, dop), jnp.float32),              # layer-2 row-tile acc
            ],
        ),
        compiler_params=pltpu.CompilerParams(
            # phase/k are reductions; rows stay sequential too because phase 1
            # reads the full h scratch written in phase 0 (single-TC design;
            # a v7x dual-TC split would need h/s2 in VMEM_SHARED/CMEM).
            dimension_semantics=("arbitrary", "arbitrary", "arbitrary"),
            vmem_limit_bytes=vmem_limit_bytes,
        ),
    )(adj_p, x_p, w1_p, b1_p, w2_p, b2_p)

    return out[:n, :d_out]


def gcn_block_forward(params, adjacency, x):
    """One-call convenience wrapper (pads every call). When the graph is reused
    across calls, hoist pad_gcn_inputs() and call gcn_forward_padded directly."""
    n, d_in = x.shape
    d_h = params["w1"].shape[1]
    d_out = params["w2"].shape[1]
    dip = _round_up(d_in, 128)
    dhp = _round_up(d_h, 128)
    dop = _round_up(d_out, 128)

    budget = _vmem_budget_bytes()
    block, adj_resident = _choose_config(n, dip, dhp, dop, budget)
    padded = pad_gcn_inputs(params, adjacency, x, block=block)
    return gcn_forward_padded(*padded, n=n, d_out=d_out, block=block,
                              adj_resident=adj_resident, vmem_limit_bytes=budget)


def kaiming_normal(key, shape, dtype=jnp.float32):
    # matches torch.nn.init.kaiming_normal_ defaults on a 2D tensor:
    # fan_in = size(1), gain = sqrt(2)  =>  std = sqrt(2 / fan_in)
    fan_in = shape[1]
    std = (2.0 / fan_in) ** 0.5
    return std * jax.random.normal(key, shape, dtype=dtype)


def init_gcn_block_params(key, input_dim, hidden_dim, output_dim):
    k1, k2 = jax.random.split(key)
    return {
        "w1": kaiming_normal(k1, (input_dim, hidden_dim)),
        "b1": jnp.zeros((hidden_dim,), jnp.float32),
        "w2": kaiming_normal(k2, (hidden_dim, output_dim)),
        "b2": jnp.zeros((output_dim,), jnp.float32),
    }


if __name__ == "__main__":
    # small but non-trivial shapes: N not a multiple of 128, odd feature dims
    # -> exercises node/feature padding and both adjacency paths below.
    num_nodes, input_dim, hidden_dim, output_dim = 200, 48, 64, 10

    key = jax.random.PRNGKey(0)
    k_adj, k_x, k_params = jax.random.split(key, 3)

    # synthetic dense, row-normalized adjacency with self loops
    adj_raw = (jax.random.uniform(k_adj, (num_nodes, num_nodes)) < 0.1).astype(jnp.float32)
    adj_raw = adj_raw + jnp.eye(num_nodes, dtype=jnp.float32)
    adjacency = adj_raw / jnp.sum(adj_raw, axis=1, keepdims=True)
    x = jax.random.normal(k_x, (num_nodes, input_dim), dtype=jnp.float32)

    params = init_gcn_block_params(k_params, input_dim, hidden_dim, output_dim)

    # generation-aware config + hoisted (reusable) padding, then the fused kernel
    budget = _vmem_budget_bytes()
    dip = _round_up(input_dim, 128)
    dhp = _round_up(hidden_dim, 128)
    dop = _round_up(output_dim, 128)
    block, adj_resident = _choose_config(num_nodes, dip, dhp, dop, budget)
    padded_inputs = pad_gcn_inputs(params, adjacency, x, block=block)  # hoisted: reuse across calls
    logits = gcn_forward_padded(*padded_inputs, n=num_nodes, d_out=output_dim,
                                block=block, adj_resident=adj_resident,
                                vmem_limit_bytes=budget)
    jax.block_until_ready(logits)
    assert logits.shape == (num_nodes, output_dim)

    # also exercise the streaming-tile fallback path (used when A exceeds VMEM)
    # with a smaller tile / multi-step grid; must match the resident-A result.
    logits_stream = gcn_forward_padded(
        *pad_gcn_inputs(params, adjacency, x, block=128),
        n=num_nodes, d_out=output_dim, block=128, adj_resident=False,
        vmem_limit_bytes=budget)
    jax.block_until_ready(logits_stream)
    assert jnp.allclose(logits, logits_stream, atol=1e-2, rtol=1e-2), \
        float(jnp.max(jnp.abs(logits - logits_stream)))

    # reference with the same bf16-input / f32-accumulate rounding as the kernel
    bfc = jnp.bfloat16
    a_bf = adjacency.astype(bfc)
    s1 = jnp.dot(x.astype(bfc), params["w1"].astype(bfc), preferred_element_type=jnp.float32)
    h = jnp.maximum(jnp.dot(a_bf, s1.astype(bfc), preferred_element_type=jnp.float32) + params["b1"], 0.0)
    s2 = jnp.dot(h.astype(bfc), params["w2"].astype(bfc), preferred_element_type=jnp.float32)
    ref = jnp.dot(a_bf, s2.astype(bfc), preferred_element_type=jnp.float32) + params["b2"]
    assert jnp.allclose(logits, ref, atol=1e-2, rtol=1e-2), float(jnp.max(jnp.abs(logits - ref)))

    # sanity check against the pure f32 reference (loose: bf16 matmul inputs)
    ref32 = jnp.maximum(adjacency @ (x @ params["w1"]) + params["b1"], 0.0)
    ref32 = adjacency @ (ref32 @ params["w2"]) + params["b2"]
    assert jnp.allclose(logits, ref32, atol=5e-2, rtol=5e-2)

    print("KERNEL_OK")
</pallas_src>

<mosaic_0001>
module attributes {stable_mosaic.version = 11 : i64} {
  func.func @kernel(%arg0: i32, %arg1: i32, %arg2: i32, %arg3: memref<256x256xbf16, #tpu.memory_space<vmem>>, %arg4: memref<256x128xbf16, #tpu.memory_space<vmem>>, %arg5: memref<128x128xbf16, #tpu.memory_space<vmem>>, %arg6: memref<1x128xf32, #tpu.memory_space<vmem>>, %arg7: memref<128x128xbf16, #tpu.memory_space<vmem>>, %arg8: memref<1x128xf32, #tpu.memory_space<vmem>>, %arg9: memref<256x128xf32, #tpu.memory_space<vmem>>, %arg10: memref<256x128xbf16, #tpu.memory_space<vmem>>, %arg11: memref<256x128xbf16, #tpu.memory_space<vmem>>, %arg12: memref<256x128xf32, #tpu.memory_space<vmem>>, %arg13: memref<256x128xf32, #tpu.memory_space<vmem>>) attributes {dimension_semantics = [#tpu.dimension_semantics<arbitrary>, #tpu.dimension_semantics<arbitrary>, #tpu.dimension_semantics<arbitrary>], iteration_bounds = array<i64: 2, 1, 1>, scalar_prefetch = 0 : i64, scratch_operands = 4 : i64, tpu.core_type = #tpu.core_type<tc>, window_params = [{pipeline_mode = #tpu.pipeline_mode<synchronous>, transform_indices = @transform_0, window_bounds = array<i64: 256, 256>}, {pipeline_mode = #tpu.pipeline_mode<synchronous>, transform_indices = @transform_1, window_bounds = array<i64: 256, 128>}, {pipeline_mode = #tpu.pipeline_mode<synchronous>, transform_indices = @transform_2, window_bounds = array<i64: 128, 128>}, {pipeline_mode = #tpu.pipeline_mode<synchronous>, transform_indices = @transform_3, window_bounds = array<i64: 1, 128>}, {pipeline_mode = #tpu.pipeline_mode<synchronous>, transform_indices = @transform_4, window_bounds = array<i64: 128, 128>}, {pipeline_mode = #tpu.pipeline_mode<synchronous>, transform_indices = @transform_5, window_bounds = array<i64: 1, 128>}, {transform_indices = @transform_6, window_bounds = array<i64: 256, 128>}]} {
    %c256_i32 = arith.constant 256 : i32
    %0 = arith.muli %arg1, %c256_i32 : i32
    %1 = tpu.assume_multiple %0, 256 : i32
    %c256_i32_0 = arith.constant 256 : i32
    %2 = arith.muli %arg2, %c256_i32_0 : i32
    %3 = tpu.assume_multiple %2, 256 : i32
    %4 = arith.index_cast %1 : i32 to index
    %5 = arith.index_cast %3 : i32 to index
    %6 = vector.load %arg3[%4, %5] : memref<256x256xbf16, #tpu.memory_space<vmem>>, vector<256x256xbf16>
    %c0_i32 = arith.constant 0 : i32
    %7 = arith.cmpi eq, %arg0, %c0_i32 : i32
    %c0_i32_1 = arith.constant 0 : i32
    %8 = arith.cmpi eq, %arg1, %c0_i32_1 : i32
    %9 = arith.andi %7, %8 : i1
    %10 = arith.extui %9 : i1 to i32
    %c0_i32_2 = arith.constant 0 : i32
    %11 = arith.cmpi ne, %10, %c0_i32_2 : i32
    scf.if %11 {
      %43 = arith.index_cast %3 : i32 to index
      %c0 = arith.constant 0 : index
      %44 = vector.load %arg4[%43, %c0] : memref<256x128xbf16, #tpu.memory_space<vmem>>, vector<256x128xbf16>
      %c0_21 = arith.constant 0 : index
      %c0_22 = arith.constant 0 : index
      %45 = vector.load %arg5[%c0_21, %c0_22] : memref<128x128xbf16, #tpu.memory_space<vmem>>, vector<128x128xbf16>
      %cst = arith.constant dense<0.000000e+00> : vector<256x128xf32>
      %46 = tpu.matmul %44, %45, %cst {dimension_numbers = #tpu.dot_dimension_numbers<[1], [0], [0], [1], [0, 0, 1, 1], [], []>} : vector<256x128xbf16>, vector<128x128xbf16>, vector<256x128xf32> -> vector<256x128xf32>
      %47 = arith.truncf %46 : vector<256x128xf32> to vector<256x128xbf16>
      %48 = arith.index_cast %3 : i32 to index
      %c0_23 = arith.constant 0 : index
      %49 = vector.load %arg10[%48, %c0_23] : memref<256x128xbf16, #tpu.memory_space<vmem>>, vector<256x128xbf16>
      tpu.vector_store %arg10[%48, %c0_23], %47 {strides = array<i32>} : memref<256x128xbf16, #tpu.memory_space<vmem>>, vector<256x128xbf16>,
    } else {
    }
    %c1_i32 = arith.constant 1 : i32
    %12 = arith.cmpi eq, %arg0, %c1_i32 : i32
    %c0_i32_3 = arith.constant 0 : i32
    %13 = arith.cmpi eq, %arg1, %c0_i32_3 : i32
    %14 = arith.andi %12, %13 : i1
    %15 = arith.extui %14 : i1 to i32
    %c0_i32_4 = arith.constant 0 : i32
    %16 = arith.cmpi ne, %15, %c0_i32_4 : i32
    scf.if %16 {
      %43 = arith.index_cast %3 : i32 to index
      %c0 = arith.constant 0 : index
      %44 = vector.load %arg11[%43, %c0] : memref<256x128xbf16, #tpu.memory_space<vmem>>, vector<256x128xbf16>
      %c0_21 = arith.constant 0 : index
      %c0_22 = arith.constant 0 : index
      %45 = vector.load %arg7[%c0_21, %c0_22] : memref<128x128xbf16, #tpu.memory_space<vmem>>, vector<128x128xbf16>
      %cst = arith.constant dense<0.000000e+00> : vector<256x128xf32>
      %46 = tpu.matmul %44, %45, %cst {dimension_numbers = #tpu.dot_dimension_numbers<[1], [0], [0], [1], [0, 0, 1, 1], [], []>} : vector<256x128xbf16>, vector<128x128xbf16>, vector<256x128xf32> -> vector<256x128xf32>
      %47 = arith.truncf %46 : vector<256x128xf32> to vector<256x128xbf16>
      %48 = arith.index_cast %3 : i32 to index
      %c0_23 = arith.constant 0 : index
      %49 = vector.load %arg10[%48, %c0_23] : memref<256x128xbf16, #tpu.memory_space<vmem>>, vector<256x128xbf16>
      tpu.vector_store %arg10[%48, %c0_23], %47 {strides = array<i32>} : memref<256x128xbf16, #tpu.memory_space<vmem>>, vector<256x128xbf16>,
    } else {
    }
    %c0_i32_5 = arith.constant 0 : i32
    %17 = arith.cmpi eq, %arg0, %c0_i32_5 : i32
    %c0_i32_6 = arith.constant 0 : i32
    %18 = arith.cmpi eq, %arg2, %c0_i32_6 : i32
    %19 = arith.andi %17, %18 : i1
    %20 = arith.extui %19 : i1 to i32
    %c0_i32_7 = arith.constant 0 : i32
    %21 = arith.cmpi ne, %20, %c0_i32_7 : i32
    scf.if %21 {
      %cst = arith.constant 0.000000e+00 : f32
      %43 = vector.broadcast %cst : f32 to vector<256x128xf32>
      %c0 = arith.constant 0 : index
      %c0_21 = arith.constant 0 : index
      %44 = vector.load %arg12[%c0, %c0_21] : memref<256x128xf32, #tpu.memory_space<vmem>>, vector<256x128xf32>
      tpu.vector_store %arg12[%c0, %c0_21], %43 {strides = array<i32>} : memref<256x128xf32, #tpu.memory_space<vmem>>, vector<256x128xf32>,
    } else {
    }
    %c0_i32_8 = arith.constant 0 : i32
    %22 = arith.cmpi eq, %arg0, %c0_i32_8 : i32
    %23 = arith.extui %22 : i1 to i32
    %c0_i32_9 = arith.constant 0 : i32
    %24 = arith.cmpi ne, %23, %c0_i32_9 : i32
    scf.if %24 {
      %c0 = arith.constant 0 : index
      %c0_21 = arith.constant 0 : index
      %43 = vector.load %arg12[%c0, %c0_21] : memref<256x128xf32, #tpu.memory_space<vmem>>, vector<256x128xf32>
      %44 = arith.index_cast %3 : i32 to index
      %c0_22 = arith.constant 0 : index
      %45 = vector.load %arg10[%44, %c0_22] : memref<256x128xbf16, #tpu.memory_space<vmem>>, vector<256x128xbf16>
      %cst = arith.constant dense<0.000000e+00> : vector<256x128xf32>
      %46 = tpu.matmul %6, %45, %cst {dimension_numbers = #tpu.dot_dimension_numbers<[1], [0], [0], [1], [0, 0, 1, 1], [], []>} : vector<256x256xbf16>, vector<256x128xbf16>, vector<256x128xf32> -> vector<256x128xf32>
      %47 = arith.addf %43, %46 : vector<256x128xf32>
      %c0_23 = arith.constant 0 : index
      %c0_24 = arith.constant 0 : index
      %48 = vector.load %arg12[%c0_23, %c0_24] : memref<256x128xf32, #tpu.memory_space<vmem>>, vector<256x128xf32>
      tpu.vector_store %arg12[%c0_23, %c0_24], %47 {strides = array<i32>} : memref<256x128xf32, #tpu.memory_space<vmem>>, vector<256x128xf32>,
    } else {
    }
    %c0_i32_10 = arith.constant 0 : i32
    %25 = arith.cmpi eq, %arg0, %c0_i32_10 : i32
    %c0_i32_11 = arith.constant 0 : i32
    %26 = arith.cmpi eq, %arg2, %c0_i32_11 : i32
    %27 = arith.andi %25, %26 : i1
    %28 = arith.extui %27 : i1 to i32
    %c0_i32_12 = arith.constant 0 : i32
    %29 = arith.cmpi ne, %28, %c0_i32_12 : i32
    scf.if %29 {
      %c0 = arith.constant 0 : index
      %c0_21 = arith.constant 0 : index
      %43 = vector.load %arg12[%c0, %c0_21] : memref<256x128xf32, #tpu.memory_space<vmem>>, vector<256x128xf32>
      %c0_22 = arith.constant 0 : index
      %c0_23 = arith.constant 0 : index
      %44 = vector.load %arg6[%c0_22, %c0_23] : memref<1x128xf32, #tpu.memory_space<vmem>>, vector<1x128xf32>
      %45 = vector.broadcast %44 : vector<1x128xf32> to vector<256x128xf32>
      %46 = arith.addf %43, %45 : vector<256x128xf32>
      %cst = arith.constant 0.000000e+00 : f32
      %47 = vector.broadcast %cst : f32 to vector<256x128xf32>
      %48 = arith.maximumf %46, %47 : vector<256x128xf32>
      %49 = arith.truncf %48 : vector<256x128xf32> to vector<256x128xbf16>
      %50 = arith.index_cast %1 : i32 to index
      %c0_24 = arith.constant 0 : index
      %51 = vector.load %arg11[%50, %c0_24] : memref<256x128xbf16, #tpu.memory_space<vmem>>, vector<256x128xbf16>
      tpu.vector_store %arg11[%50, %c0_24], %49 {strides = array<i32>} : memref<256x128xbf16, #tpu.memory_space<vmem>>, vector<256x128xbf16>,
    } else {
    }
    %c1_i32_13 = arith.constant 1 : i32
    %30 = arith.cmpi eq, %arg0, %c1_i32_13 : i32
    %c0_i32_14 = arith.constant 0 : i32
    %31 = arith.cmpi eq, %arg2, %c0_i32_14 : i32
    %32 = arith.andi %30, %31 : i1
    %33 = arith.extui %32 : i1 to i32
    %c0_i32_15 = arith.constant 0 : i32
    %34 = arith.cmpi ne, %33, %c0_i32_15 : i32
    scf.if %34 {
      %cst = arith.constant 0.000000e+00 : f32
      %43 = vector.broadcast %cst : f32 to vector<256x128xf32>
      %c0 = arith.constant 0 : index
      %c0_21 = arith.constant 0 : index
      %44 = vector.load %arg13[%c0, %c0_21] : memref<256x128xf32, #tpu.memory_space<vmem>>, vector<256x128xf32>
      tpu.vector_store %arg13[%c0, %c0_21], %43 {strides = array<i32>} : memref<256x128xf32, #tpu.memory_space<vmem>>, vector<256x128xf32>,
    } else {
    }
    %c1_i32_16 = arith.constant 1 : i32
    %35 = arith.cmpi eq, %arg0, %c1_i32_16 : i32
    %36 = arith.extui %35 : i1 to i32
    %c0_i32_17 = arith.constant 0 : i32
    %37 = arith.cmpi ne, %36, %c0_i32_17 : i32
    scf.if %37 {
      %c0 = arith.constant 0 : index
      %c0_21 = arith.constant 0 : index
      %43 = vector.load %arg13[%c0, %c0_21] : memref<256x128xf32, #tpu.memory_space<vmem>>, vector<256x128xf32>
      %44 = arith.index_cast %3 : i32 to index
      %c0_22 = arith.constant 0 : index
      %45 = vector.load %arg10[%44, %c0_22] : memref<256x128xbf16, #tpu.memory_space<vmem>>, vector<256x128xbf16>
      %cst = arith.constant dense<0.000000e+00> : vector<256x128xf32>
      %46 = tpu.matmul %6, %45, %cst {dimension_numbers = #tpu.dot_dimension_numbers<[1], [0], [0], [1], [0, 0, 1, 1], [], []>} : vector<256x256xbf16>, vector<256x128xbf16>, vector<256x128xf32> -> vector<256x128xf32>
      %47 = arith.addf %43, %46 : vector<256x128xf32>
      %c0_23 = arith.constant 0 : index
      %c0_24 = arith.constant 0 : index
      %48 = vector.load %arg13[%c0_23, %c0_24] : memref<256x128xf32, #tpu.memory_space<vmem>>, vector<256x128xf32>
      tpu.vector_store %arg13[%c0_23, %c0_24], %47 {strides = array<i32>} : memref<256x128xf32, #tpu.memory_space<vmem>>, vector<256x128xf32>,
    } else {
    }
    %c1_i32_18 = arith.constant 1 : i32
    %38 = arith.cmpi eq, %arg0, %c1_i32_18 : i32
    %c0_i32_19 = arith.constant 0 : i32
    %39 = arith.cmpi eq, %arg2, %c0_i32_19 : i32
    %40 = arith.andi %38, %39 : i1
    %41 = arith.extui %40 : i1 to i32
    %c0_i32_20 = arith.constant 0 : i32
    %42 = arith.cmpi ne, %41, %c0_i32_20 : i32
    scf.if %42 {
      %c0 = arith.constant 0 : index
      %c0_21 = arith.constant 0 : index
      %43 = vector.load %arg13[%c0, %c0_21] : memref<256x128xf32, #tpu.memory_space<vmem>>, vector<256x128xf32>
      %c0_22 = arith.constant 0 : index
      %c0_23 = arith.constant 0 : index
      %44 = vector.load %arg8[%c0_22, %c0_23] : memref<1x128xf32, #tpu.memory_space<vmem>>, vector<1x128xf32>
      %45 = vector.broadcast %44 : vector<1x128xf32> to vector<256x128xf32>
      %46 = arith.addf %43, %45 : vector<256x128xf32>
      %c0_24 = arith.constant 0 : index
      %c0_25 = arith.constant 0 : index
      %47 = vector.load %arg9[%c0_24, %c0_25] : memref<256x128xf32, #tpu.memory_space<vmem>>, vector<256x128xf32>
      tpu.vector_store %arg9[%c0_24, %c0_25], %46 {strides = array<i32>} : memref<256x128xf32, #tpu.memory_space<vmem>>, vector<256x128xf32>,
    } else {
    }
    return
  }
  func.func @transform_0(%arg0: i32, %arg1: i32, %arg2: i32) -> (i32, i32) {
    %c0_i32 = arith.constant 0 : i32
    %c0_i32_0 = arith.constant 0 : i32
    %c0_i32_1 = arith.constant 0 : i32
    return %c0_i32, %c0_i32_0 : i32, i32
  }
  func.func @transform_1(%arg0: i32, %arg1: i32, %arg2: i32) -> (i32, i32) {
    %c0_i32 = arith.constant 0 : i32
    %c0_i32_0 = arith.constant 0 : i32
    %c0_i32_1 = arith.constant 0 : i32
    return %c0_i32, %c0_i32_0 : i32, i32
  }
  func.func @transform_2(%arg0: i32, %arg1: i32, %arg2: i32) -> (i32, i32) {
    %c0_i32 = arith.constant 0 : i32
    %c0_i32_0 = arith.constant 0 : i32
    %c0_i32_1 = arith.constant 0 : i32
    return %c0_i32, %c0_i32_0 : i32, i32
  }
  func.func @transform_3(%arg0: i32, %arg1: i32, %arg2: i32) -> (i32, i32) {
    %c0_i32 = arith.constant 0 : i32
    %c0_i32_0 = arith.constant 0 : i32
    %c0_i32_1 = arith.constant 0 : i32
    return %c0_i32, %c0_i32_0 : i32, i32
  }
  func.func @transform_4(%arg0: i32, %arg1: i32, %arg2: i32) -> (i32, i32) {
    %c0_i32 = arith.constant 0 : i32
    %c0_i32_0 = arith.constant 0 : i32
    %c0_i32_1 = arith.constant 0 : i32
    return %c0_i32, %c0_i32_0 : i32, i32
  }
  func.func @transform_5(%arg0: i32, %arg1: i32, %arg2: i32) -> (i32, i32) {
    %c0_i32 = arith.constant 0 : i32
    %c0_i32_0 = arith.constant 0 : i32
    %c0_i32_1 = arith.constant 0 : i32
    return %c0_i32, %c0_i32_0 : i32, i32
  }
  func.func @transform_6(%arg0: i32, %arg1: i32, %arg2: i32) -> (i32, i32) {
    %0 = arith.muli %arg1, %arg0 : i32
    %c0_i32 = arith.constant 0 : i32
    %c0_i32_0 = arith.constant 0 : i32
    return %0, %c0_i32 : i32, i32
  }
}

</mosaic_0001>

<llo_original>
// kernel: gcn_forward_padded.1
$region0: #{gcn_forward_padded.1}
  #allocation0 [shape = 'u32[]', space=smem, size = 0x4, offset = 0x4, fixed_abs, tag = 'smem constant byte address 0x4 - core index']
  #allocation1 [shape = 'u32[144,128]{1,0:T(1,128)}', space=vmem, size = 0x12000, scoped, tag = 'internal scratch']
  #allocation2 [shape = 'bf16[256,128]{1,0:T(16,128)(2,1)}', space=vmem, size = 0x10000, scoped, tag = 'scratch operand']
  #allocation3 [shape = 'bf16[256,128]{1,0:T(16,128)(2,1)}', space=vmem, size = 0x10000, scoped, tag = 'scratch operand']
  #allocation4 [shape = 'f32[256,128]{1,0:T(8,128)}', space=vmem, size = 0x20000, scoped, tag = 'scratch operand']
  #allocation5 [shape = 'f32[256,128]{1,0:T(8,128)}', space=vmem, size = 0x20000, scoped, tag = 'scratch operand']
  %s0 = inlined_call_operand.hbm [shape: bf16[256,256], index: 0, kind: input, shape index: {}]
  %s1 = inlined_call_operand.hbm [shape: bf16[256,128], index: 1, kind: input, shape index: {}]
  %s2 = inlined_call_operand.hbm [shape: bf16[128,128], index: 2, kind: input, shape index: {}]
  %s3 = inlined_call_operand.vmem [shape: f32[1,128], index: 3, kind: input, shape index: {}]
  %s4 = inlined_call_operand.hbm [shape: bf16[128,128], index: 4, kind: input, shape index: {}]
  %s5 = inlined_call_operand.vmem [shape: f32[1,128], index: 5, kind: input, shape index: {}]
  %s6 = inlined_call_operand.vmem [shape: f32[256,128], index: 6, kind: output, shape index: {}]
  %s7 = sld [smem:[#allocation0]]
  $region105: #{gcn_forward_padded.1} parent=0
    _
  %s9 = ssub.s32 1, %s7
  %s10 = scalar_select 0, %s9, %s7
  $region1: #{gcn_forward_padded.1} parent=0
    #allocation6 [shape = 'u8[131072]{0}', space=vmem, size = 0x20000, scoped, tag = 'input window, operand 0, single buffered']
    #allocation7 [shape = 's32[2]{0}', space=sflag, size = 0x8, scoped, tag = 'scoped memory for gcn_forward_padded.1']
    #allocation8 [shape = 'u8[65536]{0}', space=vmem, size = 0x10000, scoped, tag = 'input window, operand 1, single buffered']
    #allocation9 [shape = 's32[1]{0}', space=sflag, size = 0x4, scoped, tag = 'scoped memory for gcn_forward_padded.1']
    #allocation10 [shape = 'u8[32768]{0}', space=vmem, size = 0x8000, scoped, tag = 'input window, operand 2, single buffered']
    #allocation11 [shape = 'u8[32768]{0}', space=vmem, size = 0x8000, scoped, tag = 'input window, operand 4, single buffered']
    #allocation12 [shape = 's32[1]{0}', space=sflag, size = 0x4, scoped, tag = 'scoped memory for gcn_forward_padded.1']
    %11 = vsyncpa [#allocation7], 0
    %12 = vsyncpa [#allocation9], 0
    %13 = vsyncpa [#allocation12], 0
    loop: start=0, step=1, limit=4
    $region2: #{gcn_forward_padded.1} parent=1 // loop_pre_header
      _
    $region3: #{gcn_forward_padded.1} parent=1 // loop_header
      %s15 = sphi 0, %s19
      %p16 = scmp.ge.s32.totalorder %s15, 4
      %s22 = sphi 0, %s41
      %s23 = sphi 0, %s37
      %s24 = sphi 0, %s33
      %s25 = sphi 0, %s22
      %s26 = sphi 0, %s23
      %s27 = sphi 0, %s24
      %s28 = sphi 0, %s25
      %s29 = sphi 0, %s26
      %s30 = sphi 0, %s27
      %s42 = sphi 0, %s42
      %s44 = sphi 0, %s42
      %s45 = sphi 0, %s44
      %s59 = sphi 0, %s45
      %s63 = sphi 0, %s63
      %s65 = sphi 0, %s63
      %s66 = sphi 0, %s65
      %s80 = sphi 0, %s66
      %s84 = sphi 0, %s84
      %s86 = sphi 0, %s84
      %s87 = sphi 0, %s86
      %s101 = sphi 0, %s87
      %s105 = sphi 0, %s105
      %s107 = sphi 0, %s105
      %s108 = sphi 0, %s107
      %s122 = sphi 0, %s108
      %s126 = sphi 0, %s126
      %s128 = sphi 0, %s126
      %s129 = sphi 0, %s128
      %s143 = sphi 0, %s129
      %s147 = sphi 0, %s147
      %s149 = sphi 0, %s147
      %s150 = sphi 0, %s149
      %s164 = sphi 0, %s150
      %s172 = sphi 0, %s174
      %s175 = sphi 0, %s172
      %s176 = sphi 0, %s175
      %s192 = sphi 0, %s176
    $region4: #{gcn_forward_padded.1} parent=1 // loop_header_branch
      %18 = sbr.rel (%p16) target = $region8
    $region5: #{gcn_forward_padded.1} parent=1 // loop_body
      %s20 = ssub.s32 %s15, 1
      %s21 = ssub.s32 %s15, 2
      %s31 = sadd.s32 1, %s24
      %p32 = scmp.ge.s32.totalorder %s31, 1
      %s33 = scalar_select %p32, 0, %s31
      %s34 = sadd.s32 1, %s23
      %s35 = scalar_select %p32, %s34, %s23
      %p36 = scmp.ge.s32.totalorder %s35, 1
      %s37 = scalar_select %p36, 0, %s35
      %s38 = sadd.s32 1, %s22
      %s39 = scalar_select %p36, %s38, %s22
      %p40 = scmp.ge.s32.totalorder %s39, 2
      %s41 = scalar_select %p40, 0, %s39
      %s43 = sadd.s32 %s42, 1
      %p46 = scmp.eq.s32.totalorder %s15, 1
      %p47 = scmp.ne.s32.totalorder %s42, %s44
      %p48 = scmp.eq.s32.totalorder %s15, 0
      %p49 = por %p47, %p48
      %p50 = scmp.ne.s32.totalorder %s42, %s44
      %p51 = scmp.eq.s32.totalorder %s20, 1
      %p52 = por %p50, %p51
      %p53 = scmp.ne.s32.totalorder %s44, %s45
      %p54 = scmp.eq.s32.totalorder %s20, 0
      %p55 = por %p53, %p54
      %p56 = scmp.ne.s32.totalorder %s44, %s45
      %p57 = scmp.eq.s32.totalorder %s21, 1
      %p58 = por %p56, %p57
      %p60 = scmp.ne.s32.totalorder %s45, %s59
      %p61 = scmp.eq.s32.totalorder %s21, 0
      %p62 = por %p60, %p61
      %s64 = sadd.s32 %s63, 1
      %p67 = scmp.eq.s32.totalorder %s15, 1
      %p68 = scmp.ne.s32.totalorder %s63, %s65
      %p69 = scmp.eq.s32.totalorder %s15, 0
      %p70 = por %p68, %p69
      %p71 = scmp.ne.s32.totalorder %s63, %s65
      %p72 = scmp.eq.s32.totalorder %s20, 1
      %p73 = por %p71, %p72
      %p74 = scmp.ne.s32.totalorder %s65, %s66
      %p75 = scmp.eq.s32.totalorder %s20, 0
      %p76 = por %p74, %p75
      %p77 = scmp.ne.s32.totalorder %s65, %s66
      %p78 = scmp.eq.s32.totalorder %s21, 1
      %p79 = por %p77, %p78
      %p81 = scmp.ne.s32.totalorder %s66, %s80
      %p82 = scmp.eq.s32.totalorder %s21, 0
      %p83 = por %p81, %p82
      %s85 = sadd.s32 %s84, 1
      %p88 = scmp.eq.s32.totalorder %s15, 1
      %p89 = scmp.ne.s32.totalorder %s84, %s86
      %p90 = scmp.eq.s32.totalorder %s15, 0
      %p91 = por %p89, %p90
      %p92 = scmp.ne.s32.totalorder %s84, %s86
      %p93 = scmp.eq.s32.totalorder %s20, 1
      %p94 = por %p92, %p93
      %p95 = scmp.ne.s32.totalorder %s86, %s87
      %p96 = scmp.eq.s32.totalorder %s20, 0
      %p97 = por %p95, %p96
      %p98 = scmp.ne.s32.totalorder %s86, %s87
      %p99 = scmp.eq.s32.totalorder %s21, 1
      %p100 = por %p98, %p99
      %p102 = scmp.ne.s32.totalorder %s87, %s101
      %p103 = scmp.eq.s32.totalorder %s21, 0
      %p104 = por %p102, %p103
      %s106 = sadd.s32 %s105, 1
      %p109 = scmp.eq.s32.totalorder %s15, 1
      %p110 = scmp.ne.s32.totalorder %s105, %s107
      %p111 = scmp.eq.s32.totalorder %s15, 0
      %p112 = por %p110, %p111
      %p113 = scmp.ne.s32.totalorder %s105, %s107
      %p114 = scmp.eq.s32.totalorder %s20, 1
      %p115 = por %p113, %p114
      %p116 = scmp.ne.s32.totalorder %s107, %s108
      %p117 = scmp.eq.s32.totalorder %s20, 0
      %p118 = por %p116, %p117
      %p119 = scmp.ne.s32.totalorder %s107, %s108
      %p120 = scmp.eq.s32.totalorder %s21, 1
      %p121 = por %p119, %p120
      %p123 = scmp.ne.s32.totalorder %s108, %s122
      %p124 = scmp.eq.s32.totalorder %s21, 0
      %p125 = por %p123, %p124
      %s127 = sadd.s32 %s126, 1
      %p130 = scmp.eq.s32.totalorder %s15, 1
      %p131 = scmp.ne.s32.totalorder %s126, %s128
      %p132 = scmp.eq.s32.totalorder %s15, 0
      %p133 = por %p131, %p132
      %p134 = scmp.ne.s32.totalorder %s126, %s128
      %p135 = scmp.eq.s32.totalorder %s20, 1
      %p136 = por %p134, %p135
      %p137 = scmp.ne.s32.totalorder %s128, %s129
      %p138 = scmp.eq.s32.totalorder %s20, 0
      %p139 = por %p137, %p138
      %p140 = scmp.ne.s32.totalorder %s128, %s129
      %p141 = scmp.eq.s32.totalorder %s21, 1
      %p142 = por %p140, %p141
      %p144 = scmp.ne.s32.totalorder %s129, %s143
      %p145 = scmp.eq.s32.totalorder %s21, 0
      %p146 = por %p144, %p145
      %s148 = sadd.s32 %s147, 1
      %p151 = scmp.eq.s32.totalorder %s15, 1
      %p152 = scmp.ne.s32.totalorder %s147, %s149
      %p153 = scmp.eq.s32.totalorder %s15, 0
      %p154 = por %p152, %p153
      %p155 = scmp.ne.s32.totalorder %s147, %s149
      %p156 = scmp.eq.s32.totalorder %s20, 1
      %p157 = por %p155, %p156
      %p158 = scmp.ne.s32.totalorder %s149, %s150
      %p159 = scmp.eq.s32.totalorder %s20, 0
      %p160 = por %p158, %p159
      %p161 = scmp.ne.s32.totalorder %s149, %s150
      %p162 = scmp.eq.s32.totalorder %s21, 1
      %p163 = por %p161, %p162
      %p165 = scmp.ne.s32.totalorder %s150, %s164
      %p166 = scmp.eq.s32.totalorder %s21, 0
      %p167 = por %p165, %p166
      %s168 = smul.u32 %s23, %s22
      %s169 = smul.u32 %s37, %s41
      %s170 = ssub.s32 %s168, %s169
      %p171 = scmp.eq.s32.totalorder %s170, 0
      %s173 = sadd.s32 %s172, 1
      %s174 = scalar_select %p171, %s172, %s173
      %p177 = pneg %p171
      %p178 = scmp.eq.s32.totalorder %s15, 1
      %p179 = por %p177, %p178
      %p180 = scmp.ne.s32.totalorder %s172, %s175
      %p181 = scmp.eq.s32.totalorder %s15, 0
      %p182 = por %p180, %p181
      %p183 = scmp.ne.s32.totalorder %s172, %s175
      %p184 = scmp.eq.s32.totalorder %s20, 1
      %p185 = por %p183, %p184
      %p186 = scmp.ne.s32.totalorder %s175, %s176
      %p187 = scmp.eq.s32.totalorder %s20, 0
      %p188 = por %p186, %p187
      %p189 = scmp.ne.s32.totalorder %s175, %s176
      %p190 = scmp.eq.s32.totalorder %s21, 1
      %p191 = por %p189, %p190
      %p193 = scmp.ne.s32.totalorder %s176, %s192
      %p194 = scmp.eq.s32.totalorder %s21, 0
      %p195 = por %p193, %p194
      %p196 = scmp.le.s32.totalorder 1, %s15
      %p197 = scmp.lt.s32.totalorder %s15, 3
      %p198 = pnand %p196, %p197
      %p199 = pneg %p198
      // Predicated region
      $region9: #{gcn_forward_padded.1} parent=5 // pred_check
        _
      $region10: #{gcn_forward_padded.1} parent=5 // pred_check_branch
        %201 = sbr.rel (%p198) target = $region12
      $region11: #{gcn_forward_padded.1} parent=5 // pred_region
        %s202 = ssub.s32 %s15, 1
        // Predicated region
        $region13: #{gcn_forward_padded.1} parent=11 // pred_check
          %p203 = pneg %p55
        $region14: #{gcn_forward_padded.1} parent=11 // pred_check_branch
          %205 = sbr.rel (%p203) target = $region16
        $region15: #{gcn_forward_padded.1} parent=11 // pred_region
          %s207 = ssub.s32 4096, 4096
          %208 = vsyncadd [#allocation7], %s207
          %s209 = sshll.u32 [#allocation6], 4
          %s210 = int_to_ptr.vmem [resolvable:$true] %s209
          %215 = dma.hbm_to_vmem [thread:$0]  %s0, 4096, %s210, [#allocation7], 128, 128, 8
        $region16: #{gcn_forward_padded.1} parent=11 // pred_fallthru
          _
        // Predicated region
        $region17: #{gcn_forward_padded.1} parent=11 // pred_check
          %p216 = pneg %p76
        $region18: #{gcn_forward_padded.1} parent=11 // pred_check_branch
          %218 = sbr.rel (%p216) target = $region20
        $region19: #{gcn_forward_padded.1} parent=11 // pred_region
          %s220 = ssub.s32 2048, 2048
          %221 = vsyncadd [#allocation9], %s220
          %s222 = sshll.u32 [#allocation8], 4
          %s223 = int_to_ptr.vmem [resolvable:$true] %s222
          %228 = dma.hbm_to_vmem [thread:$0]  %s1, 2048, %s223, [#allocation9], 64, 64, 4
        $region20: #{gcn_forward_padded.1} parent=11 // pred_fallthru
          _
        // Predicated region
        $region21: #{gcn_forward_padded.1} parent=11 // pred_check
          %p229 = pneg %p97
        $region22: #{gcn_forward_padded.1} parent=11 // pred_check_branch
          %231 = sbr.rel (%p229) target = $region24
        $region23: #{gcn_forward_padded.1} parent=11 // pred_region
          %s233 = ssub.s32 1024, 1024
          %234 = vsyncadd [#allocation9], %s233
          %s235 = sshll.u32 [#allocation10], 4
          %s236 = int_to_ptr.vmem [resolvable:$true] %s235
          %241 = dma.hbm_to_vmem [thread:$0]  %s2, 1024, %s236, [#allocation9], 64, 64, 4
        $region24: #{gcn_forward_padded.1} parent=11 // pred_fallthru
          _
        // Predicated region
        $region25: #{gcn_forward_padded.1} parent=11 // pred_check
          %p242 = pneg %p118
        $region26: #{gcn_forward_padded.1} parent=11 // pred_check_branch
          %244 = sbr.rel (%p242) target = $region28
        $region27: #{gcn_forward_padded.1} parent=11 // pred_region
          _
        $region28: #{gcn_forward_padded.1} parent=11 // pred_fallthru
          _
        // Predicated region
        $region29: #{gcn_forward_padded.1} parent=11 // pred_check
          %p245 = pneg %p139
        $region30: #{gcn_forward_padded.1} parent=11 // pred_check_branch
          %247 = sbr.rel (%p245) target = $region32
        $region31: #{gcn_forward_padded.1} parent=11 // pred_region
          %s249 = ssub.s32 1024, 1024
          %250 = vsyncadd [#allocation12], %s249
          %s251 = sshll.u32 [#allocation11], 4
          %s252 = int_to_ptr.vmem [resolvable:$true] %s251
          %257 = dma.hbm_to_vmem [thread:$0]  %s4, 1024, %s252, [#allocation12], 64, 64, 4
        $region32: #{gcn_forward_padded.1} parent=11 // pred_fallthru
          _
        // Predicated region
        $region33: #{gcn_forward_padded.1} parent=11 // pred_check
          %p258 = pneg %p160
        $region34: #{gcn_forward_padded.1} parent=11 // pred_check_branch
          %260 = sbr.rel (%p258) target = $region36
        $region35: #{gcn_forward_padded.1} parent=11 // pred_region
          _
        $region36: #{gcn_forward_padded.1} parent=11 // pred_fallthru
          _
      $region12: #{gcn_forward_padded.1} parent=5 // pred_fallthru
        _
      %p261 = scmp.lt.s32.totalorder %s15, 2
      // Predicated region
      $region37: #{gcn_forward_padded.1} parent=5 // pred_check
        %p262 = pneg %p261
      $region38: #{gcn_forward_padded.1} parent=5 // pred_check_branch
        %264 = sbr.rel (%p262) target = $region40
      $region39: #{gcn_forward_padded.1} parent=5 // pred_region
        _
      $region40: #{gcn_forward_padded.1} parent=5 // pred_fallthru
        _
      %p265 = scmp.le.s32.totalorder 1, %s15
      %p266 = scmp.lt.s32.totalorder %s15, 3
      %p267 = pnand %p265, %p266
      %p268 = pneg %p267
      // Predicated region
      $region41: #{gcn_forward_padded.1} parent=5 // pred_check
        _
      $region42: #{gcn_forward_padded.1} parent=5 // pred_check_branch
        %270 = sbr.rel (%p267) target = $region44
      $region43: #{gcn_forward_padded.1} parent=5 // pred_region
        %s271 = ssub.s32 %s15, 1
        // Predicated region
        $region45: #{gcn_forward_padded.1} parent=43 // pred_check
          %p272 = pneg %p55
        $region46: #{gcn_forward_padded.1} parent=43 // pred_check_branch
          %274 = sbr.rel (%p272) target = $region48
        $region47: #{gcn_forward_padded.1} parent=43 // pred_region
          %275 = dma.done [#allocation7], 4096
        $region48: #{gcn_forward_padded.1} parent=43 // pred_fallthru
          _
        // Predicated region
        $region49: #{gcn_forward_padded.1} parent=43 // pred_check
          %p276 = pneg %p76
        $region50: #{gcn_forward_padded.1} parent=43 // pred_check_branch
          %278 = sbr.rel (%p276) target = $region52
        $region51: #{gcn_forward_padded.1} parent=43 // pred_region
          %279 = dma.done [#allocation9], 2048
        $region52: #{gcn_forward_padded.1} parent=43 // pred_fallthru
          _
        // Predicated region
        $region53: #{gcn_forward_padded.1} parent=43 // pred_check
          %p280 = pneg %p97
        $region54: #{gcn_forward_padded.1} parent=43 // pred_check_branch
          %282 = sbr.rel (%p280) target = $region56
        $region55: #{gcn_forward_padded.1} parent=43 // pred_region
          %283 = dma.done [#allocation9], 1024
        $region56: #{gcn_forward_padded.1} parent=43 // pred_fallthru
          _
        // Predicated region
        $region57: #{gcn_forward_padded.1} parent=43 // pred_check
          %p284 = pneg %p139
        $region58: #{gcn_forward_padded.1} parent=43 // pred_check_branch
          %286 = sbr.rel (%p284) target = $region60
        $region59: #{gcn_forward_padded.1} parent=43 // pred_region
          %287 = dma.done [#allocation12], 1024
        $region60: #{gcn_forward_padded.1} parent=43 // pred_fallthru
          _
        %p288 = pneg %p55
        %p289 = pneg %p52
        %p290 = pneg %p76
        %p291 = pneg %p73
        %p292 = pneg %p97
        %p293 = pneg %p94
        %p294 = pneg %p118
        %p295 = pneg %p115
        %p296 = pneg %p139
        %p297 = pneg %p136
        %p298 = pneg %p160
        %p299 = pneg %p157
        %p300 = pneg %p188
        %p301 = pneg %p185
        %s302 = smul.u32 %s26, %s25
        %s303 = smul.u32 32, %s302
        %p304 = scmp.lt.s32.totalorder %s303, 31
        %s305 = scalar_select %p304, %s303, 31
        %s306 = smul.addr %s305, 8
        %s307 = scalar_lea.vmem %s6, %s306
        %s308 = smul.u32 %s26, %s25
        %s309 = smul.u32 32, %s308
        %p310 = scmp.lt.s32.totalorder %s309, 31
        %s311 = scalar_select %p310, %s309, 31
        %s312 = smul.addr %s311, 8
        %s313 = scalar_lea.vmem %s6, %s312
        %s314 = smul.u32 %s26, %s25
        %s315 = smul.u32 32, %s314
        %s317 = smul.u32 %s26, 256
        %s318 = smul.u32 %s27, 256
        %s319 = sshra.s32 %s318, 7
        %s320 = sand.u32 %s318, 127
        %s321 = sshra.s32 %s317, 3
        %s322 = sand.u32 %s317, 7
        %s323 = smul.u32 %s321, 2
        %s324 = sadd.s32 %s319, %s323
        %s325 = smul.addr %s324, 4
        %s326 = scalar_lea.vmem [#allocation6], %s325
        %v327 = vld [vmem:[%s326] sm:$0xff]
        %v328 = vld [vmem:[%s326 + $0x8] sm:$0xff]
        %v329 = vld [vmem:[%s326 + $0x10] sm:$0xff]
        %v330 = vld [vmem:[%s326 + $0x18] sm:$0xff]
        %v331 = vld [vmem:[%s326 + $0x20] sm:$0xff]
        %v332 = vld [vmem:[%s326 + $0x28] sm:$0xff]
        %v333 = vld [vmem:[%s326 + $0x30] sm:$0xff]
        %v334 = vld [vmem:[%s326 + $0x38] sm:$0xff]
        %v335 = vld [vmem:[%s326 + $0x40] sm:$0xff]
        %v336 = vld [vmem:[%s326 + $0x48] sm:$0xff]
        %v337 = vld [vmem:[%s326 + $0x50] sm:$0xff]
        %v338 = vld [vmem:[%s326 + $0x58] sm:$0xff]
        %v339 = vld [vmem:[%s326 + $0x60] sm:$0xff]
        %v340 = vld [vmem:[%s326 + $0x68] sm:$0xff]
        %v341 = vld [vmem:[%s326 + $0x70] sm:$0xff]
        %v342 = vld [vmem:[%s326 + $0x78] sm:$0xff]
        %v343 = vld [vmem:[%s326 + $0x80] sm:$0xff]
        %v344 = vld [vmem:[%s326 + $0x88] sm:$0xff]
        %v345 = vld [vmem:[%s326 + $0x90] sm:$0xff]
        %v346 = vld [vmem:[%s326 + $0x98] sm:$0xff]
        %v347 = vld [vmem:[%s326 + $0xa0] sm:$0xff]
        %v348 = vld [vmem:[%s326 + $0xa8] sm:$0xff]
        %v349 = vld [vmem:[%s326 + $0xb0] sm:$0xff]
        %v350 = vld [vmem:[%s326 + $0xb8] sm:$0xff]
        %v351 = vld [vmem:[%s326 + $0xc0] sm:$0xff]
        %v352 = vld [vmem:[%s326 + $0xc8] sm:$0xff]
        %v353 = vld [vmem:[%s326 + $0xd0] sm:$0xff]
        %v354 = vld [vmem:[%s326 + $0xd8] sm:$0xff]
        %v355 = vld [vmem:[%s326 + $0xe0] sm:$0xff]
        %v356 = vld [vmem:[%s326 + $0xe8] sm:$0xff]
        %v357 = vld [vmem:[%s326 + $0xf0] sm:$0xff]
        %v358 = vld [vmem:[%s326 + $0xf8] sm:$0xff]
        %p359 = scmp.eq.s32.totalorder %s25, 0
        %p360 = scmp.eq.s32.totalorder %s26, 0
        %p361 = pnand %p359, %p360
        %p362 = pneg %p361
        // Predicated region
        $region61: #{gcn_forward_padded.1} parent=43 // pred_check
          _
        $region62: #{gcn_forward_padded.1} parent=43 // pred_check_branch
          %364 = sbr.rel (%p361) target = $region64
        $region63: #{gcn_forward_padded.1} parent=43 // pred_region
          %s365 = sshra.s32 %s318, 3
          %s366 = sand.u32 %s318, 7
          %s367 = smul.addr %s365, 4
          %s368 = scalar_lea.vmem [#allocation8], %s367
          %v369 = vld [vmem:[%s368] sm:$0xf]
          %v370 = vld [vmem:[%s368 + $0x4] sm:$0xf]
          %v371 = vld [vmem:[%s368 + $0x8] sm:$0xf]
          %v372 = vld [vmem:[%s368 + $0xc] sm:$0xf]
          %v373 = vld [vmem:[%s368 + $0x10] sm:$0xf]
          %v374 = vld [vmem:[%s368 + $0x14] sm:$0xf]
          %v375 = vld [vmem:[%s368 + $0x18] sm:$0xf]
          %v376 = vld [vmem:[%s368 + $0x1c] sm:$0xf]
          %v377 = vld [vmem:[%s368 + $0x20] sm:$0xf]
          %v378 = vld [vmem:[%s368 + $0x24] sm:$0xf]
          %v379 = vld [vmem:[%s368 + $0x28] sm:$0xf]
          %v380 = vld [vmem:[%s368 + $0x2c] sm:$0xf]
          %v381 = vld [vmem:[%s368 + $0x30] sm:$0xf]
          %v382 = vld [vmem:[%s368 + $0x34] sm:$0xf]
          %v383 = vld [vmem:[%s368 + $0x38] sm:$0xf]
          %v384 = vld [vmem:[%s368 + $0x3c] sm:$0xf]
          %v385 = vld [vmem:[%s368 + $0x40] sm:$0xf]
          %v386 = vld [vmem:[%s368 + $0x44] sm:$0xf]
          %v387 = vld [vmem:[%s368 + $0x48] sm:$0xf]
          %v388 = vld [vmem:[%s368 + $0x4c] sm:$0xf]
          %v389 = vld [vmem:[%s368 + $0x50] sm:$0xf]
          %v390 = vld [vmem:[%s368 + $0x54] sm:$0xf]
          %v391 = vld [vmem:[%s368 + $0x58] sm:$0xf]
          %v392 = vld [vmem:[%s368 + $0x5c] sm:$0xf]
          %v393 = vld [vmem:[%s368 + $0x60] sm:$0xf]
          %v394 = vld [vmem:[%s368 + $0x64] sm:$0xf]
          %v395 = vld [vmem:[%s368 + $0x68] sm:$0xf]
          %v396 = vld [vmem:[%s368 + $0x6c] sm:$0xf]
          %v397 = vld [vmem:[%s368 + $0x70] sm:$0xf]
          %v398 = vld [vmem:[%s368 + $0x74] sm:$0xf]
          %v399 = vld [vmem:[%s368 + $0x78] sm:$0xf]
          %v400 = vld [vmem:[%s368 + $0x7c] sm:$0xf]
          %v401 = vld [vmem:[#allocation10] sm:$0xf]
          %v402 = vld [vmem:[#allocation10 + $0x4] sm:$0xf]
          %v403 = vld [vmem:[#allocation10 + $0x8] sm:$0xf]
          %v404 = vld [vmem:[#allocation10 + $0xc] sm:$0xf]
          %v405 = vld [vmem:[#allocation10 + $0x10] sm:$0xf]
          %v406 = vld [vmem:[#allocation10 + $0x14] sm:$0xf]
          %v407 = vld [vmem:[#allocation10 + $0x18] sm:$0xf]
          %v408 = vld [vmem:[#allocation10 + $0x1c] sm:$0xf]
          %v409 = vld [vmem:[#allocation10 + $0x20] sm:$0xf]
          %v410 = vld [vmem:[#allocation10 + $0x24] sm:$0xf]
          %v411 = vld [vmem:[#allocation10 + $0x28] sm:$0xf]
          %v412 = vld [vmem:[#allocation10 + $0x2c] sm:$0xf]
          %v413 = vld [vmem:[#allocation10 + $0x30] sm:$0xf]
          %v414 = vld [vmem:[#allocation10 + $0x34] sm:$0xf]
          %v415 = vld [vmem:[#allocation10 + $0x38] sm:$0xf]
          %v416 = vld [vmem:[#allocation10 + $0x3c] sm:$0xf]
          %v449 = vunpack.c.l.b16 %v369
          %v450 = vunpack.c.l.b16 %v370
          %v451 = vunpack.c.l.b16 %v371
          %v452 = vunpack.c.l.b16 %v372
          %v453 = vunpack.c.l.b16 %v373
          %v454 = vunpack.c.l.b16 %v374
          %v455 = vunpack.c.l.b16 %v375
          %v456 = vunpack.c.l.b16 %v376
          %v457 = vunpack.c.l.b16 %v377
          %v458 = vunpack.c.l.b16 %v378
          %v459 = vunpack.c.l.b16 %v379
          %v460 = vunpack.c.l.b16 %v380
          %v461 = vunpack.c.l.b16 %v381
          %v462 = vunpack.c.l.b16 %v382
          %v463 = vunpack.c.l.b16 %v383
          %v464 = vunpack.c.l.b16 %v384
          %v465 = vunpack.c.l.b16 %v385
          %v466 = vunpack.c.l.b16 %v386
          %v467 = vunpack.c.l.b16 %v387
          %v468 = vunpack.c.l.b16 %v388
          %v469 = vunpack.c.l.b16 %v389
          %v470 = vunpack.c.l.b16 %v390
          %v471 = vunpack.c.l.b16 %v391
          %v472 = vunpack.c.l.b16 %v392
          %v473 = vunpack.c.l.b16 %v393
          %v474 = vunpack.c.l.b16 %v394
          %v475 = vunpack.c.l.b16 %v395
          %v476 = vunpack.c.l.b16 %v396
          %v477 = vunpack.c.l.b16 %v397
          %v478 = vunpack.c.l.b16 %v398
          %v479 = vunpack.c.l.b16 %v399
          %v480 = vunpack.c.l.b16 %v400
          %v481 = vpack.c.b16 %v450, %v449
          %v482 = vpack.c.b16 %v452, %v451
          %v483 = vpack.c.b16 %v454, %v453
          %v484 = vpack.c.b16 %v456, %v455
          %v485 = vpack.c.b16 %v458, %v457
          %v486 = vpack.c.b16 %v460, %v459
          %v487 = vpack.c.b16 %v462, %v461
          %v488 = vpack.c.b16 %v464, %v463
          %v489 = vpack.c.b16 %v466, %v465
          %v490 = vpack.c.b16 %v468, %v467
          %v491 = vpack.c.b16 %v470, %v469
          %v492 = vpack.c.b16 %v472, %v471
          %v493 = vpack.c.b16 %v474, %v473
          %v494 = vpack.c.b16 %v476, %v475
          %v495 = vpack.c.b16 %v478, %v477
          %v496 = vpack.c.b16 %v480, %v479
          %v529 = vunpack.c.l.b16 %v401
          %v530 = vunpack.c.l.b16 %v402
          %v531 = vunpack.c.l.b16 %v403
          %v532 = vunpack.c.l.b16 %v404
          %v533 = vunpack.c.l.b16 %v405
          %v534 = vunpack.c.l.b16 %v406
          %v535 = vunpack.c.l.b16 %v407
          %v536 = vunpack.c.l.b16 %v408
          %v537 = vunpack.c.l.b16 %v409
          %v538 = vunpack.c.l.b16 %v410
          %v539 = vunpack.c.l.b16 %v411
          %v540 = vunpack.c.l.b16 %v412
          %v541 = vunpack.c.l.b16 %v413
          %v542 = vunpack.c.l.b16 %v414
          %v543 = vunpack.c.l.b16 %v415
          %v544 = vunpack.c.l.b16 %v416
          %v545 = vpack.c.b16 %v530, %v529
          %v546 = vpack.c.b16 %v532, %v531
          %v547 = vpack.c.b16 %v534, %v533
          %v548 = vpack.c.b16 %v536, %v535
          %v549 = vpack.c.b16 %v538, %v537
          %v550 = vpack.c.b16 %v540, %v539
          %v551 = vpack.c.b16 %v542, %v541
          %v552 = vpack.c.b16 %v544, %v543
          %561 = vmatprep.subr.bf16.mxu0 0
          %562 = vmatpush1.bf16.msra.mxu0 %v545
          %563 = vmatprep.subr.bf16.mxu0 0
          %564 = vmatpush1.bf16.msra.mxu0 %v546
          %565 = vmatprep.subr.bf16.mxu0 0
          %566 = vmatpush1.bf16.msra.mxu0 %v547
          %567 = vmatprep.subr.bf16.mxu0 0
          %568 = vmatpush1.bf16.msra.mxu0 %v548
          %569 = vmatprep.subr.bf16.mxu0 0
          %570 = vmatpush1.bf16.msra.mxu0 %v549
          %571 = vmatprep.subr.bf16.mxu0 0
          %572 = vmatpush1.bf16.msra.mxu0 %v550
          %573 = vmatprep.subr.bf16.mxu0 0
          %574 = vmatpush1.bf16.msra.mxu0 %v551
          %575 = vmatprep.subr.bf16.mxu0 0
          %576 = vmatpush1.bf16.msra.mxu0 %v552
          %577 = vmatprep.subr.bf16.mxu0 0
          %578 = vmatpush1.bf16.msra.mxu0 0
          %579 = vmatprep.subr.bf16.mxu0 0
          %580 = vmatpush1.bf16.msra.mxu0 0
          %581 = vmatprep.subr.bf16.mxu0 0
          %582 = vmatpush1.bf16.msra.mxu0 0
          %583 = vmatprep.subr.bf16.mxu0 0
          %584 = vmatpush1.bf16.msra.mxu0 0
          %585 = vmatprep.subr.bf16.mxu0 0
          %586 = vmatpush1.bf16.msra.mxu0 0
          %587 = vmatprep.subr.bf16.mxu0 0
          %588 = vmatpush1.bf16.msra.mxu0 0
          %589 = vmatprep.subr.bf16.mxu0 0
          %590 = vmatpush1.bf16.msra.mxu0 0
          %591 = vmatprep.subr.bf16.mxu0 0
          %592 = vmatpush1.bf16.msra.mxu0 0
          %593 = vmatprep.mubr.bf16.mxu0 0
          %594 = vmatmul.mubr.bf16.gmra.mrb[0].mxu0 %v481
          %v595 = vpop.f32.mrb[0].mxu0
          %v596 = vadd.f32 0.0, %v595
          %v597 = vpop.f32.mrb[0].mxu0
          %v598 = vpop.f32.mrb[0].mxu0
          %v599 = vadd.f32 0.0, %v598
          %v600 = vpop.f32.mrb[0].mxu0
          %601 = vmatprep.mubr.bf16.mxu0 0
          %602 = vmatmul.mubr.bf16.gmra.mrb[0].mxu0 %v482
          %v603 = vpop.f32.mrb[0].mxu0
          %v604 = vadd.f32 0.0, %v603
          %v605 = vpop.f32.mrb[0].mxu0
          %v606 = vpop.f32.mrb[0].mxu0
          %v607 = vadd.f32 0.0, %v606
          %v608 = vpop.f32.mrb[0].mxu0
          %609 = vmatprep.mubr.bf16.mxu0 0
          %610 = vmatmul.mubr.bf16.gmra.mrb[0].mxu0 %v483
          %v611 = vpop.f32.mrb[0].mxu0
          %v612 = vadd.f32 0.0, %v611
          %v613 = vpop.f32.mrb[0].mxu0
          %v614 = vpop.f32.mrb[0].mxu0
          %v615 = vadd.f32 0.0, %v614
          %v616 = vpop.f32.mrb[0].mxu0
          %617 = vmatprep.mubr.bf16.mxu0 0
          %618 = vmatmul.mubr.bf16.gmra.mrb[0].mxu0 %v484
          %v619 = vpop.f32.mrb[0].mxu0
          %v620 = vadd.f32 0.0, %v619
          %v621 = vpop.f32.mrb[0].mxu0
          %v622 = vpop.f32.mrb[0].mxu0
          %v623 = vadd.f32 0.0, %v622
          %v624 = vpop.f32.mrb[0].mxu0
          %625 = vmatprep.mubr.bf16.mxu0 0
          %626 = vmatmul.mubr.bf16.gmra.mrb[0].mxu0 %v485
          %v627 = vpop.f32.mrb[0].mxu0
          %v628 = vadd.f32 0.0, %v627
          %v629 = vpop.f32.mrb[0].mxu0
          %v630 = vpop.f32.mrb[0].mxu0
          %v631 = vadd.f32 0.0, %v630
          %v632 = vpop.f32.mrb[0].mxu0
          %633 = vmatprep.mubr.bf16.mxu0 0
          %634 = vmatmul.mubr.bf16.gmra.mrb[0].mxu0 %v486
          %v635 = vpop.f32.mrb[0].mxu0
          %v636 = vadd.f32 0.0, %v635
          %v637 = vpop.f32.mrb[0].mxu0
          %v638 = vpop.f32.mrb[0].mxu0
          %v639 = vadd.f32 0.0, %v638
          %v640 = vpop.f32.mrb[0].mxu0
          %641 = vmatprep.mubr.bf16.mxu0 0
          %642 = vmatmul.mubr.bf16.gmra.mrb[0].mxu0 %v487
          %v643 = vpop.f32.mrb[0].mxu0
          %v644 = vadd.f32 0.0, %v643
          %v645 = vpop.f32.mrb[0].mxu0
          %v646 = vpop.f32.mrb[0].mxu0
          %v647 = vadd.f32 0.0, %v646
          %v648 = vpop.f32.mrb[0].mxu0
          %649 = vmatprep.mubr.bf16.mxu0 0
          %650 = vmatmul.mubr.bf16.gmra.mrb[0].mxu0 %v488
          %v651 = vpop.f32.mrb[0].mxu0
          %v652 = vadd.f32 0.0, %v651
          %v653 = vpop.f32.mrb[0].mxu0
          %v654 = vpop.f32.mrb[0].mxu0
          %v655 = vadd.f32 0.0, %v654
          %v656 = vpop.f32.mrb[0].mxu0
          %657 = vmatprep.mubr.bf16.mxu0 0
          %658 = vmatmul.mubr.bf16.gmra.mrb[0].mxu0 %v489
          %v659 = vpop.f32.mrb[0].mxu0
          %v660 = vadd.f32 0.0, %v659
          %v661 = vpop.f32.mrb[0].mxu0
          %v662 = vpop.f32.mrb[0].mxu0
          %v663 = vadd.f32 0.0, %v662
          %v664 = vpop.f32.mrb[0].mxu0
          %665 = vmatprep.mubr.bf16.mxu0 0
          %666 = vmatmul.mubr.bf16.gmra.mrb[0].mxu0 %v490
          %v667 = vpop.f32.mrb[0].mxu0
          %v668 = vadd.f32 0.0, %v667
          %v669 = vpop.f32.mrb[0].mxu0
          %v670 = vpop.f32.mrb[0].mxu0
          %v671 = vadd.f32 0.0, %v670
          %v672 = vpop.f32.mrb[0].mxu0
          %673 = vmatprep.mubr.bf16.mxu0 0
          %674 = vmatmul.mubr.bf16.gmra.mrb[0].mxu0 %v491
          %v675 = vpop.f32.mrb[0].mxu0
          %v676 = vadd.f32 0.0, %v675
          %v677 = vpop.f32.mrb[0].mxu0
          %v678 = vpop.f32.mrb[0].mxu0
          %v679 = vadd.f32 0.0, %v678
          %v680 = vpop.f32.mrb[0].mxu0
          %681 = vmatprep.mubr.bf16.mxu0 0
          %682 = vmatmul.mubr.bf16.gmra.mrb[0].mxu0 %v492
          %v683 = vpop.f32.mrb[0].mxu0
          %v684 = vadd.f32 0.0, %v683
          %v685 = vpop.f32.mrb[0].mxu0
          %v686 = vpop.f32.mrb[0].mxu0
          %v687 = vadd.f32 0.0, %v686
          %v688 = vpop.f32.mrb[0].mxu0
          %689 = vmatprep.mubr.bf16.mxu0 0
          %690 = vmatmul.mubr.bf16.gmra.mrb[0].mxu0 %v493
          %v691 = vpop.f32.mrb[0].mxu0
          %v692 = vadd.f32 0.0, %v691
          %v693 = vpop.f32.mrb[0].mxu0
          %v694 = vpop.f32.mrb[0].mxu0
          %v695 = vadd.f32 0.0, %v694
          %v696 = vpop.f32.mrb[0].mxu0
          %697 = vmatprep.mubr.bf16.mxu0 0
          %698 = vmatmul.mubr.bf16.gmra.mrb[0].mxu0 %v494
          %v699 = vpop.f32.mrb[0].mxu0
          %v700 = vadd.f32 0.0, %v699
          %v701 = vpop.f32.mrb[0].mxu0
          %v702 = vpop.f32.mrb[0].mxu0
          %v703 = vadd.f32 0.0, %v702
          %v704 = vpop.f32.mrb[0].mxu0
          %705 = vmatprep.mubr.bf16.mxu0 0
          %706 = vmatmul.mubr.bf16.gmra.mrb[0].mxu0 %v495
          %v707 = vpop.f32.mrb[0].mxu0
          %v708 = vadd.f32 0.0, %v707
          %v709 = vpop.f32.mrb[0].mxu0
          %v710 = vpop.f32.mrb[0].mxu0
          %v711 = vadd.f32 0.0, %v710
          %v712 = vpop.f32.mrb[0].mxu0
          %713 = vmatprep.mubr.bf16.mxu0 0
          %714 = vmatmul.mubr.bf16.gmra.mrb[0].mxu0 %v496
          %v715 = vpop.f32.mrb[0].mxu0
          %v716 = vadd.f32 0.0, %v715
          %v717 = vpop.f32.mrb[0].mxu0
          %v718 = vpop.f32.mrb[0].mxu0
          %v719 = vadd.f32 0.0, %v718
          %v720 = vpop.f32.mrb[0].mxu0
          %721 = vdwg.mxu0
          %v722 = vpack.c.bf16 %v599, %v596
          %v723 = vpack.c.bf16 %v607, %v604
          %v724 = vpack.c.bf16 %v615, %v612
          %v725 = vpack.c.bf16 %v623, %v620
          %v726 = vpack.c.bf16 %v631, %v628
          %v727 = vpack.c.bf16 %v639, %v636
          %v728 = vpack.c.bf16 %v647, %v644
          %v729 = vpack.c.bf16 %v655, %v652
          %v730 = vpack.c.bf16 %v663, %v660
          %v731 = vpack.c.bf16 %v671, %v668
          %v732 = vpack.c.bf16 %v679, %v676
          %v733 = vpack.c.bf16 %v687, %v684
          %v734 = vpack.c.bf16 %v695, %v692
          %v735 = vpack.c.bf16 %v703, %v700
          %v736 = vpack.c.bf16 %v711, %v708
          %v737 = vpack.c.bf16 %v719, %v716
          %s738 = sshra.s32 %s318, 4
          %s739 = sand.u32 %s318, 15
          %s740 = smul.addr %s738, 8
          %s741 = scalar_lea.vmem [#allocation2], %s740
          %742 = vst [vmem:[%s741] sm:$0xff] %v722
          %743 = vst [vmem:[%s741 + $0x8] sm:$0xff] %v723
          %744 = vst [vmem:[%s741 + $0x10] sm:$0xff] %v724
          %745 = vst [vmem:[%s741 + $0x18] sm:$0xff] %v725
          %746 = vst [vmem:[%s741 + $0x20] sm:$0xff] %v726
          %747 = vst [vmem:[%s741 + $0x28] sm:$0xff] %v727
          %748 = vst [vmem:[%s741 + $0x30] sm:$0xff] %v728
          %749 = vst [vmem:[%s741 + $0x38] sm:$0xff] %v729
          %750 = vst [vmem:[%s741 + $0x40] sm:$0xff] %v730
          %751 = vst [vmem:[%s741 + $0x48] sm:$0xff] %v731
          %752 = vst [vmem:[%s741 + $0x50] sm:$0xff] %v732
          %753 = vst [vmem:[%s741 + $0x58] sm:$0xff] %v733
          %754 = vst [vmem:[%s741 + $0x60] sm:$0xff] %v734
          %755 = vst [vmem:[%s741 + $0x68] sm:$0xff] %v735
          %756 = vst [vmem:[%s741 + $0x70] sm:$0xff] %v736
          %757 = vst [vmem:[%s741 + $0x78] sm:$0xff] %v737
        $region64: #{gcn_forward_padded.1} parent=43 // pred_fallthru
          _
        %p758 = scmp.eq.s32.totalorder %s25, 1
        %p759 = pnand %p758, %p360
        %p760 = pneg %p759
        // Predicated region
        $region65: #{gcn_forward_padded.1} parent=43 // pred_check
          _
        $region66: #{gcn_forward_padded.1} parent=43 // pred_check_branch
          %762 = sbr.rel (%p759) target = $region68
        $region67: #{gcn_forward_padded.1} parent=43 // pred_region
          %s763 = sshra.s32 %s318, 4
          %s764 = sand.u32 %s318, 15
          %s765 = smul.addr %s763, 8
          %s766 = scalar_lea.vmem [#allocation3], %s765
          %v767 = vld [vmem:[%s766] sm:$0xff]
          %v768 = vld [vmem:[%s766 + $0x8] sm:$0xff]
          %v769 = vld [vmem:[%s766 + $0x10] sm:$0xff]
          %v770 = vld [vmem:[%s766 + $0x18] sm:$0xff]
          %v771 = vld [vmem:[%s766 + $0x20] sm:$0xff]
          %v772 = vld [vmem:[%s766 + $0x28] sm:$0xff]
          %v773 = vld [vmem:[%s766 + $0x30] sm:$0xff]
          %v774 = vld [vmem:[%s766 + $0x38] sm:$0xff]
          %v775 = vld [vmem:[%s766 + $0x40] sm:$0xff]
          %v776 = vld [vmem:[%s766 + $0x48] sm:$0xff]
          %v777 = vld [vmem:[%s766 + $0x50] sm:$0xff]
          %v778 = vld [vmem:[%s766 + $0x58] sm:$0xff]
          %v779 = vld [vmem:[%s766 + $0x60] sm:$0xff]
          %v780 = vld [vmem:[%s766 + $0x68] sm:$0xff]
          %v781 = vld [vmem:[%s766 + $0x70] sm:$0xff]
          %v782 = vld [vmem:[%s766 + $0x78] sm:$0xff]
          %v783 = vld [vmem:[#allocation11] sm:$0xf]
          %v784 = vld [vmem:[#allocation11 + $0x4] sm:$0xf]
          %v785 = vld [vmem:[#allocation11 + $0x8] sm:$0xf]
          %v786 = vld [vmem:[#allocation11 + $0xc] sm:$0xf]
          %v787 = vld [vmem:[#allocation11 + $0x10] sm:$0xf]
          %v788 = vld [vmem:[#allocation11 + $0x14] sm:$0xf]
          %v789 = vld [vmem:[#allocation11 + $0x18] sm:$0xf]
          %v790 = vld [vmem:[#allocation11 + $0x1c] sm:$0xf]
          %v791 = vld [vmem:[#allocation11 + $0x20] sm:$0xf]
          %v792 = vld [vmem:[#allocation11 + $0x24] sm:$0xf]
          %v793 = vld [vmem:[#allocation11 + $0x28] sm:$0xf]
          %v794 = vld [vmem:[#allocation11 + $0x2c] sm:$0xf]
          %v795 = vld [vmem:[#allocation11 + $0x30] sm:$0xf]
          %v796 = vld [vmem:[#allocation11 + $0x34] sm:$0xf]
          %v797 = vld [vmem:[#allocation11 + $0x38] sm:$0xf]
          %v798 = vld [vmem:[#allocation11 + $0x3c] sm:$0xf]
          %v815 = vunpack.c.l.b16 %v783
          %v816 = vunpack.c.l.b16 %v784
          %v817 = vunpack.c.l.b16 %v785
          %v818 = vunpack.c.l.b16 %v786
          %v819 = vunpack.c.l.b16 %v787
          %v820 = vunpack.c.l.b16 %v788
          %v821 = vunpack.c.l.b16 %v789
          %v822 = vunpack.c.l.b16 %v790
          %v823 = vunpack.c.l.b16 %v791
          %v824 = vunpack.c.l.b16 %v792
          %v825 = vunpack.c.l.b16 %v793
          %v826 = vunpack.c.l.b16 %v794
          %v827 = vunpack.c.l.b16 %v795
          %v828 = vunpack.c.l.b16 %v796
          %v829 = vunpack.c.l.b16 %v797
          %v830 = vunpack.c.l.b16 %v798
          %v831 = vpack.c.b16 %v816, %v815
          %v832 = vpack.c.b16 %v818, %v817
          %v833 = vpack.c.b16 %v820, %v819
          %v834 = vpack.c.b16 %v822, %v821
          %v835 = vpack.c.b16 %v824, %v823
          %v836 = vpack.c.b16 %v826, %v825
          %v837 = vpack.c.b16 %v828, %v827
          %v838 = vpack.c.b16 %v830, %v829
          %847 = vmatprep.subr.bf16.mxu0 0
          %848 = vmatpush1.bf16.msra.mxu0 %v831
          %849 = vmatprep.subr.bf16.mxu0 0
          %850 = vmatpush1.bf16.msra.mxu0 %v832
          %851 = vmatprep.subr.bf16.mxu0 0
          %852 = vmatpush1.bf16.msra.mxu0 %v833
          %853 = vmatprep.subr.bf16.mxu0 0
          %854 = vmatpush1.bf16.msra.mxu0 %v834
          %855 = vmatprep.subr.bf16.mxu0 0
          %856 = vmatpush1.bf16.msra.mxu0 %v835
          %857 = vmatprep.subr.bf16.mxu0 0
          %858 = vmatpush1.bf16.msra.mxu0 %v836
          %859 = vmatprep.subr.bf16.mxu0 0
          %860 = vmatpush1.bf16.msra.mxu0 %v837
          %861 = vmatprep.subr.bf16.mxu0 0
          %862 = vmatpush1.bf16.msra.mxu0 %v838
          %863 = vmatprep.subr.bf16.mxu0 0
          %864 = vmatpush1.bf16.msra.mxu0 0
          %865 = vmatprep.subr.bf16.mxu0 0
          %866 = vmatpush1.bf16.msra.mxu0 0
          %867 = vmatprep.subr.bf16.mxu0 0
          %868 = vmatpush1.bf16.msra.mxu0 0
          %869 = vmatprep.subr.bf16.mxu0 0
          %870 = vmatpush1.bf16.msra.mxu0 0
          %871 = vmatprep.subr.bf16.mxu0 0
          %872 = vmatpush1.bf16.msra.mxu0 0
          %873 = vmatprep.subr.bf16.mxu0 0
          %874 = vmatpush1.bf16.msra.mxu0 0
          %875 = vmatprep.subr.bf16.mxu0 0
          %876 = vmatpush1.bf16.msra.mxu0 0
          %877 = vmatprep.subr.bf16.mxu0 0
          %878 = vmatpush1.bf16.msra.mxu0 0
          %879 = vmatprep.mubr.bf16.mxu0 0
          %880 = vmatmul.mubr.bf16.gmra.mrb[0].mxu0 %v767
          %v881 = vpop.f32.mrb[0].mxu0
          %v882 = vadd.f32 0.0, %v881
          %v883 = vpop.f32.mrb[0].mxu0
          %v884 = vpop.f32.mrb[0].mxu0
          %v885 = vadd.f32 0.0, %v884
          %v886 = vpop.f32.mrb[0].mxu0
          %887 = vmatprep.mubr.bf16.mxu0 0
          %888 = vmatmul.mubr.bf16.gmra.mrb[0].mxu0 %v768
          %v889 = vpop.f32.mrb[0].mxu0
          %v890 = vadd.f32 0.0, %v889
          %v891 = vpop.f32.mrb[0].mxu0
          %v892 = vpop.f32.mrb[0].mxu0
          %v893 = vadd.f32 0.0, %v892
          %v894 = vpop.f32.mrb[0].mxu0
          %895 = vmatprep.mubr.bf16.mxu0 0
          %896 = vmatmul.mubr.bf16.gmra.mrb[0].mxu0 %v769
          %v897 = vpop.f32.mrb[0].mxu0
          %v898 = vadd.f32 0.0, %v897
          %v899 = vpop.f32.mrb[0].mxu0
          %v900 = vpop.f32.mrb[0].mxu0
          %v901 = vadd.f32 0.0, %v900
          %v902 = vpop.f32.mrb[0].mxu0
          %903 = vmatprep.mubr.bf16.mxu0 0
          %904 = vmatmul.mubr.bf16.gmra.mrb[0].mxu0 %v770
          %v905 = vpop.f32.mrb[0].mxu0
          %v906 = vadd.f32 0.0, %v905
          %v907 = vpop.f32.mrb[0].mxu0
          %v908 = vpop.f32.mrb[0].mxu0
          %v909 = vadd.f32 0.0, %v908
          %v910 = vpop.f32.mrb[0].mxu0
          %911 = vmatprep.mubr.bf16.mxu0 0
          %912 = vmatmul.mubr.bf16.gmra.mrb[0].mxu0 %v771
          %v913 = vpop.f32.mrb[0].mxu0
          %v914 = vadd.f32 0.0, %v913
          %v915 = vpop.f32.mrb[0].mxu0
          %v916 = vpop.f32.mrb[0].mxu0
          %v917 = vadd.f32 0.0, %v916
          %v918 = vpop.f32.mrb[0].mxu0
          %919 = vmatprep.mubr.bf16.mxu0 0
          %920 = vmatmul.mubr.bf16.gmra.mrb[0].mxu0 %v772
          %v921 = vpop.f32.mrb[0].mxu0
          %v922 = vadd.f32 0.0, %v921
          %v923 = vpop.f32.mrb[0].mxu0
          %v924 = vpop.f32.mrb[0].mxu0
          %v925 = vadd.f32 0.0, %v924
          %v926 = vpop.f32.mrb[0].mxu0
          %927 = vmatprep.mubr.bf16.mxu0 0
          %928 = vmatmul.mubr.bf16.gmra.mrb[0].mxu0 %v773
          %v929 = vpop.f32.mrb[0].mxu0
          %v930 = vadd.f32 0.0, %v929
          %v931 = vpop.f32.mrb[0].mxu0
          %v932 = vpop.f32.mrb[0].mxu0
          %v933 = vadd.f32 0.0, %v932
          %v934 = vpop.f32.mrb[0].mxu0
          %935 = vmatprep.mubr.bf16.mxu0 0
          %936 = vmatmul.mubr.bf16.gmra.mrb[0].mxu0 %v774
          %v937 = vpop.f32.mrb[0].mxu0
          %v938 = vadd.f32 0.0, %v937
          %v939 = vpop.f32.mrb[0].mxu0
          %v940 = vpop.f32.mrb[0].mxu0
          %v941 = vadd.f32 0.0, %v940
          %v942 = vpop.f32.mrb[0].mxu0
          %943 = vmatprep.mubr.bf16.mxu0 0
          %944 = vmatmul.mubr.bf16.gmra.mrb[0].mxu0 %v775
          %v945 = vpop.f32.mrb[0].mxu0
          %v946 = vadd.f32 0.0, %v945
          %v947 = vpop.f32.mrb[0].mxu0
          %v948 = vpop.f32.mrb[0].mxu0
          %v949 = vadd.f32 0.0, %v948
          %v950 = vpop.f32.mrb[0].mxu0
          %951 = vmatprep.mubr.bf16.mxu0 0
          %952 = vmatmul.mubr.bf16.gmra.mrb[0].mxu0 %v776
          %v953 = vpop.f32.mrb[0].mxu0
          %v954 = vadd.f32 0.0, %v953
          %v955 = vpop.f32.mrb[0].mxu0
          %v956 = vpop.f32.mrb[0].mxu0
          %v957 = vadd.f32 0.0, %v956
          %v958 = vpop.f32.mrb[0].mxu0
          %959 = vmatprep.mubr.bf16.mxu0 0
          %960 = vmatmul.mubr.bf16.gmra.mrb[0].mxu0 %v777
          %v961 = vpop.f32.mrb[0].mxu0
          %v962 = vadd.f32 0.0, %v961
          %v963 = vpop.f32.mrb[0].mxu0
          %v964 = vpop.f32.mrb[0].mxu0
          %v965 = vadd.f32 0.0, %v964
          %v966 = vpop.f32.mrb[0].mxu0
          %967 = vmatprep.mubr.bf16.mxu0 0
          %968 = vmatmul.mubr.bf16.gmra.mrb[0].mxu0 %v778
          %v969 = vpop.f32.mrb[0].mxu0
          %v970 = vadd.f32 0.0, %v969
          %v971 = vpop.f32.mrb[0].mxu0
          %v972 = vpop.f32.mrb[0].mxu0
          %v973 = vadd.f32 0.0, %v972
          %v974 = vpop.f32.mrb[0].mxu0
          %975 = vmatprep.mubr.bf16.mxu0 0
          %976 = vmatmul.mubr.bf16.gmra.mrb[0].mxu0 %v779
          %v977 = vpop.f32.mrb[0].mxu0
          %v978 = vadd.f32 0.0, %v977
          %v979 = vpop.f32.mrb[0].mxu0
          %v980 = vpop.f32.mrb[0].mxu0
          %v981 = vadd.f32 0.0, %v980
          %v982 = vpop.f32.mrb[0].mxu0
          %983 = vmatprep.mubr.bf16.mxu0 0
          %984 = vmatmul.mubr.bf16.gmra.mrb[0].mxu0 %v780
          %v985 = vpop.f32.mrb[0].mxu0
          %v986 = vadd.f32 0.0, %v985
          %v987 = vpop.f32.mrb[0].mxu0
          %v988 = vpop.f32.mrb[0].mxu0
          %v989 = vadd.f32 0.0, %v988
          %v990 = vpop.f32.mrb[0].mxu0
          %991 = vmatprep.mubr.bf16.mxu0 0
          %992 = vmatmul.mubr.bf16.gmra.mrb[0].mxu0 %v781
          %v993 = vpop.f32.mrb[0].mxu0
          %v994 = vadd.f32 0.0, %v993
          %v995 = vpop.f32.mrb[0].mxu0
          %v996 = vpop.f32.mrb[0].mxu0
          %v997 = vadd.f32 0.0, %v996
          %v998 = vpop.f32.mrb[0].mxu0
          %999 = vmatprep.mubr.bf16.mxu0 0
          %1000 = vmatmul.mubr.bf16.gmra.mrb[0].mxu0 %v782
          %v1001 = vpop.f32.mrb[0].mxu0
          %v1002 = vadd.f32 0.0, %v1001
          %v1003 = vpop.f32.mrb[0].mxu0
          %v1004 = vpop.f32.mrb[0].mxu0
          %v1005 = vadd.f32 0.0, %v1004
          %v1006 = vpop.f32.mrb[0].mxu0
          %1007 = vdwg.mxu0
          %v1008 = vpack.c.bf16 %v885, %v882
          %v1009 = vpack.c.bf16 %v893, %v890
          %v1010 = vpack.c.bf16 %v901, %v898
          %v1011 = vpack.c.bf16 %v909, %v906
          %v1012 = vpack.c.bf16 %v917, %v914
          %v1013 = vpack.c.bf16 %v925, %v922
          %v1014 = vpack.c.bf16 %v933, %v930
          %v1015 = vpack.c.bf16 %v941, %v938
          %v1016 = vpack.c.bf16 %v949, %v946
          %v1017 = vpack.c.bf16 %v957, %v954
          %v1018 = vpack.c.bf16 %v965, %v962
          %v1019 = vpack.c.bf16 %v973, %v970
          %v1020 = vpack.c.bf16 %v981, %v978
          %v1021 = vpack.c.bf16 %v989, %v986
          %v1022 = vpack.c.bf16 %v997, %v994
          %v1023 = vpack.c.bf16 %v1005, %v1002
          %s1024 = smul.addr %s763, 8
          %s1025 = scalar_lea.vmem [#allocation2], %s1024
          %1026 = vst [vmem:[%s1025] sm:$0xff] %v1008
          %1027 = vst [vmem:[%s1025 + $0x8] sm:$0xff] %v1009
          %1028 = vst [vmem:[%s1025 + $0x10] sm:$0xff] %v1010
          %1029 = vst [vmem:[%s1025 + $0x18] sm:$0xff] %v1011
          %1030 = vst [vmem:[%s1025 + $0x20] sm:$0xff] %v1012
          %1031 = vst [vmem:[%s1025 + $0x28] sm:$0xff] %v1013
          %1032 = vst [vmem:[%s1025 + $0x30] sm:$0xff] %v1014
          %1033 = vst [vmem:[%s1025 + $0x38] sm:$0xff] %v1015
          %1034 = vst [vmem:[%s1025 + $0x40] sm:$0xff] %v1016
          %1035 = vst [vmem:[%s1025 + $0x48] sm:$0xff] %v1017
          %1036 = vst [vmem:[%s1025 + $0x50] sm:$0xff] %v1018
          %1037 = vst [vmem:[%s1025 + $0x58] sm:$0xff] %v1019
          %1038 = vst [vmem:[%s1025 + $0x60] sm:$0xff] %v1020
          %1039 = vst [vmem:[%s1025 + $0x68] sm:$0xff] %v1021
          %1040 = vst [vmem:[%s1025 + $0x70] sm:$0xff] %v1022
          %1041 = vst [vmem:[%s1025 + $0x78] sm:$0xff] %v1023
        $region68: #{gcn_forward_padded.1} parent=43 // pred_fallthru
          _
        %p1042 = scmp.eq.s32.totalorder %s27, 0
        %p1043 = pnand %p359, %p1042
        %p1044 = pneg %p1043
        // Predicated region
        $region69: #{gcn_forward_padded.1} parent=43 // pred_check
          _
        $region70: #{gcn_forward_padded.1} parent=43 // pred_check_branch
          %1046 = sbr.rel (%p1043) target = $region72
        $region71: #{gcn_forward_padded.1} parent=43 // pred_region
          %1047 = vst [vmem:[#allocation4] sm:$0xff] 0.0
          %1048 = vst [vmem:[#allocation4 + $0x8] sm:$0xff] 0.0
          %1049 = vst [vmem:[#allocation4 + $0x10] sm:$0xff] 0.0
          %1050 = vst [vmem:[#allocation4 + $0x18] sm:$0xff] 0.0
          %1051 = vst [vmem:[#allocation4 + $0x20] sm:$0xff] 0.0
          %1052 = vst [vmem:[#allocation4 + $0x28] sm:$0xff] 0.0
          %1053 = vst [vmem:[#allocation4 + $0x30] sm:$0xff] 0.0
          %1054 = vst [vmem:[#allocation4 + $0x38] sm:$0xff] 0.0
          %1055 = vst [vmem:[#allocation4 + $0x40] sm:$0xff] 0.0
          %1056 = vst [vmem:[#allocation4 + $0x48] sm:$0xff] 0.0
          %1057 = vst [vmem:[#allocation4 + $0x50] sm:$0xff] 0.0
          %1058 = vst [vmem:[#allocation4 + $0x58] sm:$0xff] 0.0
          %1059 = vst [vmem:[#allocation4 + $0x60] sm:$0xff] 0.0
          %1060 = vst [vmem:[#allocation4 + $0x68] sm:$0xff] 0.0
          %1061 = vst [vmem:[#allocation4 + $0x70] sm:$0xff] 0.0
          %1062 = vst [vmem:[#allocation4 + $0x78] sm:$0xff] 0.0
          %1063 = vst [vmem:[#allocation4 + $0x80] sm:$0xff] 0.0
          %1064 = vst [vmem:[#allocation4 + $0x88] sm:$0xff] 0.0
          %1065 = vst [vmem:[#allocation4 + $0x90] sm:$0xff] 0.0
          %1066 = vst [vmem:[#allocation4 + $0x98] sm:$0xff] 0.0
          %1067 = vst [vmem:[#allocation4 + $0xa0] sm:$0xff] 0.0
          %1068 = vst [vmem:[#allocation4 + $0xa8] sm:$0xff] 0.0
          %1069 = vst [vmem:[#allocation4 + $0xb0] sm:$0xff] 0.0
          %1070 = vst [vmem:[#allocation4 + $0xb8] sm:$0xff] 0.0
          %1071 = vst [vmem:[#allocation4 + $0xc0] sm:$0xff] 0.0
          %1072 = vst [vmem:[#allocation4 + $0xc8] sm:$0xff] 0.0
          %1073 = vst [vmem:[#allocation4 + $0xd0] sm:$0xff] 0.0
          %1074 = vst [vmem:[#allocation4 + $0xd8] sm:$0xff] 0.0
          %1075 = vst [vmem:[#allocation4 + $0xe0] sm:$0xff] 0.0
          %1076 = vst [vmem:[#allocation4 + $0xe8] sm:$0xff] 0.0
          %1077 = vst [vmem:[#allocation4 + $0xf0] sm:$0xff] 0.0
          %1078 = vst [vmem:[#allocation4 + $0xf8] sm:$0xff] 0.0
        $region72: #{gcn_forward_padded.1} parent=43 // pred_fallthru
          _
        // Predicated region
        $region73: #{gcn_forward_padded.1} parent=43 // pred_check
          %p1079 = pneg %p359
        $region74: #{gcn_forward_padded.1} parent=43 // pred_check_branch
          %1081 = sbr.rel (%p1079) target = $region76
        $region75: #{gcn_forward_padded.1} parent=43 // pred_region
          %v1082 = vld [vmem:[#allocation4] sm:$0xff]
          %v1083 = vld [vmem:[#allocation4 + $0x8] sm:$0xff]
          %v1084 = vld [vmem:[#allocation4 + $0x10] sm:$0xff]
          %v1085 = vld [vmem:[#allocation4 + $0x18] sm:$0xff]
          %v1086 = vld [vmem:[#allocation4 + $0x20] sm:$0xff]
          %v1087 = vld [vmem:[#allocation4 + $0x28] sm:$0xff]
          %v1088 = vld [vmem:[#allocation4 + $0x30] sm:$0xff]
          %v1089 = vld [vmem:[#allocation4 + $0x38] sm:$0xff]
          %v1090 = vld [vmem:[#allocation4 + $0x40] sm:$0xff]
          %v1091 = vld [vmem:[#allocation4 + $0x48] sm:$0xff]
          %v1092 = vld [vmem:[#allocation4 + $0x50] sm:$0xff]
          %v1093 = vld [vmem:[#allocation4 + $0x58] sm:$0xff]
          %v1094 = vld [vmem:[#allocation4 + $0x60] sm:$0xff]
          %v1095 = vld [vmem:[#allocation4 + $0x68] sm:$0xff]
          %v1096 = vld [vmem:[#allocation4 + $0x70] sm:$0xff]
          %v1097 = vld [vmem:[#allocation4 + $0x78] sm:$0xff]
          %v1098 = vld [vmem:[#allocation4 + $0x80] sm:$0xff]
          %v1099 = vld [vmem:[#allocation4 + $0x88] sm:$0xff]
          %v1100 = vld [vmem:[#allocation4 + $0x90] sm:$0xff]
          %v1101 = vld [vmem:[#allocation4 + $0x98] sm:$0xff]
          %v1102 = vld [vmem:[#allocation4 + $0xa0] sm:$0xff]
          %v1103 = vld [vmem:[#allocation4 + $0xa8] sm:$0xff]
          %v1104 = vld [vmem:[#allocation4 + $0xb0] sm:$0xff]
          %v1105 = vld [vmem:[#allocation4 + $0xb8] sm:$0xff]
          %v1106 = vld [vmem:[#allocation4 + $0xc0] sm:$0xff]
          %v1107 = vld [vmem:[#allocation4 + $0xc8] sm:$0xff]
          %v1108 = vld [vmem:[#allocation4 + $0xd0] sm:$0xff]
          %v1109 = vld [vmem:[#allocation4 + $0xd8] sm:$0xff]
          %v1110 = vld [vmem:[#allocation4 + $0xe0] sm:$0xff]
          %v1111 = vld [vmem:[#allocation4 + $0xe8] sm:$0xff]
          %v1112 = vld [vmem:[#allocation4 + $0xf0] sm:$0xff]
          %v1113 = vld [vmem:[#allocation4 + $0xf8] sm:$0xff]
          %s1114 = sshra.s32 %s318, 4
          %s1115 = sand.u32 %s318, 15
          %s1116 = smul.addr %s1114, 8
          %s1117 = scalar_lea.vmem [#allocation2], %s1116
          %v1118 = vld [vmem:[%s1117] sm:$0xff]
          %v1119 = vld [vmem:[%s1117 + $0x8] sm:$0xff]
          %v1120 = vld [vmem:[%s1117 + $0x10] sm:$0xff]
          %v1121 = vld [vmem:[%s1117 + $0x18] sm:$0xff]
          %v1122 = vld [vmem:[%s1117 + $0x20] sm:$0xff]
          %v1123 = vld [vmem:[%s1117 + $0x28] sm:$0xff]
          %v1124 = vld [vmem:[%s1117 + $0x30] sm:$0xff]
          %v1125 = vld [vmem:[%s1117 + $0x38] sm:$0xff]
          %v1126 = vld [vmem:[%s1117 + $0x40] sm:$0xff]
          %v1127 = vld [vmem:[%s1117 + $0x48] sm:$0xff]
          %v1128 = vld [vmem:[%s1117 + $0x50] sm:$0xff]
          %v1129 = vld [vmem:[%s1117 + $0x58] sm:$0xff]
          %v1130 = vld [vmem:[%s1117 + $0x60] sm:$0xff]
          %v1131 = vld [vmem:[%s1117 + $0x68] sm:$0xff]
          %v1132 = vld [vmem:[%s1117 + $0x70] sm:$0xff]
          %v1133 = vld [vmem:[%s1117 + $0x78] sm:$0xff]
          %v1166 = vunpack.c.l.b16 %v327
          %v1167 = vunpack.c.h.b16 %v327
          %v1168 = vunpack.c.l.b16 %v328
          %v1169 = vunpack.c.h.b16 %v328
          %v1170 = vunpack.c.l.b16 %v329
          %v1171 = vunpack.c.h.b16 %v329
          %v1172 = vunpack.c.l.b16 %v330
          %v1173 = vunpack.c.h.b16 %v330
          %v1174 = vunpack.c.l.b16 %v331
          %v1175 = vunpack.c.h.b16 %v331
          %v1176 = vunpack.c.l.b16 %v332
          %v1177 = vunpack.c.h.b16 %v332
          %v1178 = vunpack.c.l.b16 %v333
          %v1179 = vunpack.c.h.b16 %v333
          %v1180 = vunpack.c.l.b16 %v334
          %v1181 = vunpack.c.h.b16 %v334
          %v1182 = vunpack.c.l.b16 %v335
          %v1183 = vunpack.c.h.b16 %v335
          %v1184 = vunpack.c.l.b16 %v336
          %v1185 = vunpack.c.h.b16 %v336
          %v1186 = vunpack.c.l.b16 %v337
          %v1187 = vunpack.c.h.b16 %v337
          %v1188 = vunpack.c.l.b16 %v338
          %v1189 = vunpack.c.h.b16 %v338
          %v1190 = vunpack.c.l.b16 %v339
          %v1191 = vunpack.c.h.b16 %v339
          %v1192 = vunpack.c.l.b16 %v340
          %v1193 = vunpack.c.h.b16 %v340
          %v1194 = vunpack.c.l.b16 %v341
          %v1195 = vunpack.c.h.b16 %v341
          %v1196 = vunpack.c.l.b16 %v342
          %v1197 = vunpack.c.h.b16 %v342
          %v1198 = vunpack.c.l.b16 %v343
          %v1199 = vunpack.c.h.b16 %v343
          %v1200 = vunpack.c.l.b16 %v344
          %v1201 = vunpack.c.h.b16 %v344
          %v1202 = vunpack.c.l.b16 %v345
          %v1203 = vunpack.c.h.b16 %v345
          %v1204 = vunpack.c.l.b16 %v346
          %v1205 = vunpack.c.h.b16 %v346
          %v1206 = vunpack.c.l.b16 %v347
          %v1207 = vunpack.c.h.b16 %v347
          %v1208 = vunpack.c.l.b16 %v348
          %v1209 = vunpack.c.h.b16 %v348
          %v1210 = vunpack.c.l.b16 %v349
          %v1211 = vunpack.c.h.b16 %v349
          %v1212 = vunpack.c.l.b16 %v350
          %v1213 = vunpack.c.h.b16 %v350
          %v1214 = vunpack.c.l.b16 %v351
          %v1215 = vunpack.c.h.b16 %v351
          %v1216 = vunpack.c.l.b16 %v352
          %v1217 = vunpack.c.h.b16 %v352
          %v1218 = vunpack.c.l.b16 %v353
          %v1219 = vunpack.c.h.b16 %v353
          %v1220 = vunpack.c.l.b16 %v354
          %v1221 = vunpack.c.h.b16 %v354
          %v1222 = vunpack.c.l.b16 %v355
          %v1223 = vunpack.c.h.b16 %v355
          %v1224 = vunpack.c.l.b16 %v356
          %v1225 = vunpack.c.h.b16 %v356
          %v1226 = vunpack.c.l.b16 %v357
          %v1227 = vunpack.c.h.b16 %v357
          %v1228 = vunpack.c.l.b16 %v358
          %v1229 = vunpack.c.h.b16 %v358
          %v1230 = vpack.c.b16 %v1168, %v1166
          %v1231 = vpack.c.b16 %v1169, %v1167
          %v1232 = vpack.c.b16 %v1172, %v1170
          %v1233 = vpack.c.b16 %v1173, %v1171
          %v1234 = vpack.c.b16 %v1176, %v1174
          %v1235 = vpack.c.b16 %v1177, %v1175
          %v1236 = vpack.c.b16 %v1180, %v1178
          %v1237 = vpack.c.b16 %v1181, %v1179
          %v1238 = vpack.c.b16 %v1184, %v1182
          %v1239 = vpack.c.b16 %v1185, %v1183
          %v1240 = vpack.c.b16 %v1188, %v1186
          %v1241 = vpack.c.b16 %v1189, %v1187
          %v1242 = vpack.c.b16 %v1192, %v1190
          %v1243 = vpack.c.b16 %v1193, %v1191
          %v1244 = vpack.c.b16 %v1196, %v1194
          %v1245 = vpack.c.b16 %v1197, %v1195
          %v1246 = vpack.c.b16 %v1200, %v1198
          %v1247 = vpack.c.b16 %v1201, %v1199
          %v1248 = vpack.c.b16 %v1204, %v1202
          %v1249 = vpack.c.b16 %v1205, %v1203
          %v1250 = vpack.c.b16 %v1208, %v1206
          %v1251 = vpack.c.b16 %v1209, %v1207
          %v1252 = vpack.c.b16 %v1212, %v1210
          %v1253 = vpack.c.b16 %v1213, %v1211
          %v1254 = vpack.c.b16 %v1216, %v1214
          %v1255 = vpack.c.b16 %v1217, %v1215
          %v1256 = vpack.c.b16 %v1220, %v1218
          %v1257 = vpack.c.b16 %v1221, %v1219
          %v1258 = vpack.c.b16 %v1224, %v1222
          %v1259 = vpack.c.b16 %v1225, %v1223
          %v1260 = vpack.c.b16 %v1228, %v1226
          %v1261 = vpack.c.b16 %v1229, %v1227
          %1294 = vmatprep.subr.bf16.mxu0 0
          %1295 = vmatpush1.bf16.msra.mxu0 %v1118
          %1296 = vmatprep.subr.bf16.mxu0 0
          %1297 = vmatpush1.bf16.msra.mxu0 %v1119
          %1298 = vmatprep.subr.bf16.mxu0 0
          %1299 = vmatpush1.bf16.msra.mxu0 %v1120
          %1300 = vmatprep.subr.bf16.mxu0 0
          %1301 = vmatpush1.bf16.msra.mxu0 %v1121
          %1302 = vmatprep.subr.bf16.mxu0 0
          %1303 = vmatpush1.bf16.msra.mxu0 %v1122
          %1304 = vmatprep.subr.bf16.mxu0 0
          %1305 = vmatpush1.bf16.msra.mxu0 %v1123
          %1306 = vmatprep.subr.bf16.mxu0 0
          %1307 = vmatpush1.bf16.msra.mxu0 %v1124
          %1308 = vmatprep.subr.bf16.mxu0 0
          %1309 = vmatpush1.bf16.msra.mxu0 %v1125
          %1310 = vmatprep.subr.bf16.mxu0 0
          %1311 = vmatpush1.bf16.msra.mxu0 %v1126
          %1312 = vmatprep.subr.bf16.mxu0 0
          %1313 = vmatpush1.bf16.msra.mxu0 %v1127
          %1314 = vmatprep.subr.bf16.mxu0 0
          %1315 = vmatpush1.bf16.msra.mxu0 %v1128
          %1316 = vmatprep.subr.bf16.mxu0 0
          %1317 = vmatpush1.bf16.msra.mxu0 %v1129
          %1318 = vmatprep.subr.bf16.mxu0 0
          %1319 = vmatpush1.bf16.msra.mxu0 %v1130
          %1320 = vmatprep.subr.bf16.mxu0 0
          %1321 = vmatpush1.bf16.msra.mxu0 %v1131
          %1322 = vmatprep.subr.bf16.mxu0 0
          %1323 = vmatpush1.bf16.msra.mxu0 %v1132
          %1324 = vmatprep.subr.bf16.mxu0 0
          %1325 = vmatpush1.bf16.msra.mxu0 %v1133
          %1326 = vmatprep.mubr.bf16.mxu0 %v1231
          %1327 = vmatmul.mubr.bf16.gmra.mrb[0].mxu0 %v1230
          %v1328 = vpop.f32.mrb[0].mxu0
          %v1329 = vadd.f32 0.0, %v1328
          %v1330 = vpop.f32.mrb[0].mxu0
          %v1331 = vpop.f32.mrb[0].mxu0
          %v1332 = vadd.f32 0.0, %v1331
          %v1333 = vpop.f32.mrb[0].mxu0
          %1334 = vmatprep.mubr.bf16.mxu0 %v1233
          %1335 = vmatmul.mubr.bf16.gmra.mrb[0].mxu0 %v1232
          %v1336 = vpop.f32.mrb[0].mxu0
          %v1337 = vadd.f32 0.0, %v1336
          %v1338 = vpop.f32.mrb[0].mxu0
          %v1339 = vpop.f32.mrb[0].mxu0
          %v1340 = vadd.f32 0.0, %v1339
          %v1341 = vpop.f32.mrb[0].mxu0
          %1342 = vmatprep.mubr.bf16.mxu0 %v1235
          %1343 = vmatmul.mubr.bf16.gmra.mrb[0].mxu0 %v1234
          %v1344 = vpop.f32.mrb[0].mxu0
          %v1345 = vadd.f32 0.0, %v1344
          %v1346 = vpop.f32.mrb[0].mxu0
          %v1347 = vpop.f32.mrb[0].mxu0
          %v1348 = vadd.f32 0.0, %v1347
          %v1349 = vpop.f32.mrb[0].mxu0
          %1350 = vmatprep.mubr.bf16.mxu0 %v1237
          %1351 = vmatmul.mubr.bf16.gmra.mrb[0].mxu0 %v1236
          %v1352 = vpop.f32.mrb[0].mxu0
          %v1353 = vadd.f32 0.0, %v1352
          %v1354 = vpop.f32.mrb[0].mxu0
          %v1355 = vpop.f32.mrb[0].mxu0
          %v1356 = vadd.f32 0.0, %v1355
          %v1357 = vpop.f32.mrb[0].mxu0
          %1358 = vmatprep.mubr.bf16.mxu0 %v1239
          %1359 = vmatmul.mubr.bf16.gmra.mrb[0].mxu0 %v1238
          %v1360 = vpop.f32.mrb[0].mxu0
          %v1361 = vadd.f32 0.0, %v1360
          %v1362 = vpop.f32.mrb[0].mxu0
          %v1363 = vpop.f32.mrb[0].mxu0
          %v1364 = vadd.f32 0.0, %v1363
          %v1365 = vpop.f32.mrb[0].mxu0
          %1366 = vmatprep.mubr.bf16.mxu0 %v1241
          %1367 = vmatmul.mubr.bf16.gmra.mrb[0].mxu0 %v1240
          %v1368 = vpop.f32.mrb[0].mxu0
          %v1369 = vadd.f32 0.0, %v1368
          %v1370 = vpop.f32.mrb[0].mxu0
          %v1371 = vpop.f32.mrb[0].mxu0
          %v1372 = vadd.f32 0.0, %v1371
          %v1373 = vpop.f32.mrb[0].mxu0
          %1374 = vmatprep.mubr.bf16.mxu0 %v1243
          %1375 = vmatmul.mubr.bf16.gmra.mrb[0].mxu0 %v1242
          %v1376 = vpop.f32.mrb[0].mxu0
          %v1377 = vadd.f32 0.0, %v1376
          %v1378 = vpop.f32.mrb[0].mxu0
          %v1379 = vpop.f32.mrb[0].mxu0
          %v1380 = vadd.f32 0.0, %v1379
          %v1381 = vpop.f32.mrb[0].mxu0
          %1382 = vmatprep.mubr.bf16.mxu0 %v1245
          %1383 = vmatmul.mubr.bf16.gmra.mrb[0].mxu0 %v1244
          %v1384 = vpop.f32.mrb[0].mxu0
          %v1385 = vadd.f32 0.0, %v1384
          %v1386 = vpop.f32.mrb[0].mxu0
          %v1387 = vpop.f32.mrb[0].mxu0
          %v1388 = vadd.f32 0.0, %v1387
          %v1389 = vpop.f32.mrb[0].mxu0
          %1390 = vmatprep.mubr.bf16.mxu0 %v1247
          %1391 = vmatmul.mubr.bf16.gmra.mrb[0].mxu0 %v1246
          %v1392 = vpop.f32.mrb[0].mxu0
          %v1393 = vadd.f32 0.0, %v1392
          %v1394 = vpop.f32.mrb[0].mxu0
          %v1395 = vpop.f32.mrb[0].mxu0
          %v1396 = vadd.f32 0.0, %v1395
          %v1397 = vpop.f32.mrb[0].mxu0
          %1398 = vmatprep.mubr.bf16.mxu0 %v1249
          %1399 = vmatmul.mubr.bf16.gmra.mrb[0].mxu0 %v1248
          %v1400 = vpop.f32.mrb[0].mxu0
          %v1401 = vadd.f32 0.0, %v1400
          %v1402 = vpop.f32.mrb[0].mxu0
          %v1403 = vpop.f32.mrb[0].mxu0
          %v1404 = vadd.f32 0.0, %v1403
          %v1405 = vpop.f32.mrb[0].mxu0
          %1406 = vmatprep.mubr.bf16.mxu0 %v1251
          %1407 = vmatmul.mubr.bf16.gmra.mrb[0].mxu0 %v1250
          %v1408 = vpop.f32.mrb[0].mxu0
          %v1409 = vadd.f32 0.0, %v1408
          %v1410 = vpop.f32.mrb[0].mxu0
          %v1411 = vpop.f32.mrb[0].mxu0
          %v1412 = vadd.f32 0.0, %v1411
          %v1413 = vpop.f32.mrb[0].mxu0
          %1414 = vmatprep.mubr.bf16.mxu0 %v1253
          %1415 = vmatmul.mubr.bf16.gmra.mrb[0].mxu0 %v1252
          %v1416 = vpop.f32.mrb[0].mxu0
          %v1417 = vadd.f32 0.0, %v1416
          %v1418 = vpop.f32.mrb[0].mxu0
          %v1419 = vpop.f32.mrb[0].mxu0
          %v1420 = vadd.f32 0.0, %v1419
          %v1421 = vpop.f32.mrb[0].mxu0
          %1422 = vmatprep.mubr.bf16.mxu0 %v1255
          %1423 = vmatmul.mubr.bf16.gmra.mrb[0].mxu0 %v1254
          %v1424 = vpop.f32.mrb[0].mxu0
          %v1425 = vadd.f32 0.0, %v1424
          %v1426 = vpop.f32.mrb[0].mxu0
          %v1427 = vpop.f32.mrb[0].mxu0
          %v1428 = vadd.f32 0.0, %v1427
          %v1429 = vpop.f32.mrb[0].mxu0
          %1430 = vmatprep.mubr.bf16.mxu0 %v1257
          %1431 = vmatmul.mubr.bf16.gmra.mrb[0].mxu0 %v1256
          %v1432 = vpop.f32.mrb[0].mxu0
          %v1433 = vadd.f32 0.0, %v1432
          %v1434 = vpop.f32.mrb[0].mxu0
          %v1435 = vpop.f32.mrb[0].mxu0
          %v1436 = vadd.f32 0.0, %v1435
          %v1437 = vpop.f32.mrb[0].mxu0
          %1438 = vmatprep.mubr.bf16.mxu0 %v1259
          %1439 = vmatmul.mubr.bf16.gmra.mrb[0].mxu0 %v1258
          %v1440 = vpop.f32.mrb[0].mxu0
          %v1441 = vadd.f32 0.0, %v1440
          %v1442 = vpop.f32.mrb[0].mxu0
          %v1443 = vpop.f32.mrb[0].mxu0
          %v1444 = vadd.f32 0.0, %v1443
          %v1445 = vpop.f32.mrb[0].mxu0
          %1446 = vmatprep.mubr.bf16.mxu0 %v1261
          %1447 = vmatmul.mubr.bf16.gmra.mrb[0].mxu0 %v1260
          %v1448 = vpop.f32.mrb[0].mxu0
          %v1449 = vadd.f32 0.0, %v1448
          %v1450 = vpop.f32.mrb[0].mxu0
          %v1451 = vpop.f32.mrb[0].mxu0
          %v1452 = vadd.f32 0.0, %v1451
          %v1453 = vpop.f32.mrb[0].mxu0
          %1454 = vdwg.mxu0
          %v1455 = vadd.f32 %v1082, %v1329
          %v1456 = vadd.f32 %v1083, %v1332
          %v1457 = vadd.f32 %v1084, %v1337
          %v1458 = vadd.f32 %v1085, %v1340
          %v1459 = vadd.f32 %v1086, %v1345
          %v1460 = vadd.f32 %v1087, %v1348
          %v1461 = vadd.f32 %v1088, %v1353
          %v1462 = vadd.f32 %v1089, %v1356
          %v1463 = vadd.f32 %v1090, %v1361
          %v1464 = vadd.f32 %v1091, %v1364
          %v1465 = vadd.f32 %v1092, %v1369
          %v1466 = vadd.f32 %v1093, %v1372
          %v1467 = vadd.f32 %v1094, %v1377
          %v1468 = vadd.f32 %v1095, %v1380
          %v1469 = vadd.f32 %v1096, %v1385
          %v1470 = vadd.f32 %v1097, %v1388
          %v1471 = vadd.f32 %v1098, %v1393
          %v1472 = vadd.f32 %v1099, %v1396
          %v1473 = vadd.f32 %v1100, %v1401
          %v1474 = vadd.f32 %v1101, %v1404
          %v1475 = vadd.f32 %v1102, %v1409
          %v1476 = vadd.f32 %v1103, %v1412
          %v1477 = vadd.f32 %v1104, %v1417
          %v1478 = vadd.f32 %v1105, %v1420
          %v1479 = vadd.f32 %v1106, %v1425
          %v1480 = vadd.f32 %v1107, %v1428
          %v1481 = vadd.f32 %v1108, %v1433
          %v1482 = vadd.f32 %v1109, %v1436
          %v1483 = vadd.f32 %v1110, %v1441
          %v1484 = vadd.f32 %v1111, %v1444
          %v1485 = vadd.f32 %v1112, %v1449
          %v1486 = vadd.f32 %v1113, %v1452
          %1487 = vst [vmem:[#allocation4] sm:$0xff] %v1455
          %1488 = vst [vmem:[#allocation4 + $0x8] sm:$0xff] %v1456
          %1489 = vst [vmem:[#allocation4 + $0x10] sm:$0xff] %v1457
          %1490 = vst [vmem:[#allocation4 + $0x18] sm:$0xff] %v1458
          %1491 = vst [vmem:[#allocation4 + $0x20] sm:$0xff] %v1459
          %1492 = vst [vmem:[#allocation4 + $0x28] sm:$0xff] %v1460
          %1493 = vst [vmem:[#allocation4 + $0x30] sm:$0xff] %v1461
          %1494 = vst [vmem:[#allocation4 + $0x38] sm:$0xff] %v1462
          %1495 = vst [vmem:[#allocation4 + $0x40] sm:$0xff] %v1463
          %1496 = vst [vmem:[#allocation4 + $0x48] sm:$0xff] %v1464
          %1497 = vst [vmem:[#allocation4 + $0x50] sm:$0xff] %v1465
          %1498 = vst [vmem:[#allocation4 + $0x58] sm:$0xff] %v1466
          %1499 = vst [vmem:[#allocation4 + $0x60] sm:$0xff] %v1467
          %1500 = vst [vmem:[#allocation4 + $0x68] sm:$0xff] %v1468
          %1501 = vst [vmem:[#allocation4 + $0x70] sm:$0xff] %v1469
          %1502 = vst [vmem:[#allocation4 + $0x78] sm:$0xff] %v1470
          %1503 = vst [vmem:[#allocation4 + $0x80] sm:$0xff] %v1471
          %1504 = vst [vmem:[#allocation4 + $0x88] sm:$0xff] %v1472
          %1505 = vst [vmem:[#allocation4 + $0x90] sm:$0xff] %v1473
          %1506 = vst [vmem:[#allocation4 + $0x98] sm:$0xff] %v1474
          %1507 = vst [vmem:[#allocation4 + $0xa0] sm:$0xff] %v1475
          %1508 = vst [vmem:[#allocation4 + $0xa8] sm:$0xff] %v1476
          %1509 = vst [vmem:[#allocation4 + $0xb0] sm:$0xff] %v1477
          %1510 = vst [vmem:[#allocation4 + $0xb8] sm:$0xff] %v1478
          %1511 = vst [vmem:[#allocation4 + $0xc0] sm:$0xff] %v1479
          %1512 = vst [vmem:[#allocation4 + $0xc8] sm:$0xff] %v1480
          %1513 = vst [vmem:[#allocation4 + $0xd0] sm:$0xff] %v1481
          %1514 = vst [vmem:[#allocation4 + $0xd8] sm:$0xff] %v1482
          %1515 = vst [vmem:[#allocation4 + $0xe0] sm:$0xff] %v1483
          %1516 = vst [vmem:[#allocation4 + $0xe8] sm:$0xff] %v1484
          %1517 = vst [vmem:[#allocation4 + $0xf0] sm:$0xff] %v1485
          %1518 = vst [vmem:[#allocation4 + $0xf8] sm:$0xff] %v1486
        $region76: #{gcn_forward_padded.1} parent=43 // pred_fallthru
          _
        // Predicated region
        $region77: #{gcn_forward_padded.1} parent=43 // pred_check
          _
        $region78: #{gcn_forward_padded.1} parent=43 // pred_check_branch
          %1520 = sbr.rel (%p1043) target = $region80
        $region79: #{gcn_forward_padded.1} parent=43 // pred_region
          %v1521 = vld [vmem:[#allocation4] sm:$0xff]
          %v1522 = vld [vmem:[#allocation4 + $0x8] sm:$0xff]
          %v1523 = vld [vmem:[#allocation4 + $0x10] sm:$0xff]
          %v1524 = vld [vmem:[#allocation4 + $0x18] sm:$0xff]
          %v1525 = vld [vmem:[#allocation4 + $0x20] sm:$0xff]
          %v1526 = vld [vmem:[#allocation4 + $0x28] sm:$0xff]
          %v1527 = vld [vmem:[#allocation4 + $0x30] sm:$0xff]
          %v1528 = vld [vmem:[#allocation4 + $0x38] sm:$0xff]
          %v1529 = vld [vmem:[#allocation4 + $0x40] sm:$0xff]
          %v1530 = vld [vmem:[#allocation4 + $0x48] sm:$0xff]
          %v1531 = vld [vmem:[#allocation4 + $0x50] sm:$0xff]
          %v1532 = vld [vmem:[#allocation4 + $0x58] sm:$0xff]
          %v1533 = vld [vmem:[#allocation4 + $0x60] sm:$0xff]
          %v1534 = vld [vmem:[#allocation4 + $0x68] sm:$0xff]
          %v1535 = vld [vmem:[#allocation4 + $0x70] sm:$0xff]
          %v1536 = vld [vmem:[#allocation4 + $0x78] sm:$0xff]
          %v1537 = vld [vmem:[#allocation4 + $0x80] sm:$0xff]
          %v1538 = vld [vmem:[#allocation4 + $0x88] sm:$0xff]
          %v1539 = vld [vmem:[#allocation4 + $0x90] sm:$0xff]
          %v1540 = vld [vmem:[#allocation4 + $0x98] sm:$0xff]
          %v1541 = vld [vmem:[#allocation4 + $0xa0] sm:$0xff]
          %v1542 = vld [vmem:[#allocation4 + $0xa8] sm:$0xff]
          %v1543 = vld [vmem:[#allocation4 + $0xb0] sm:$0xff]
          %v1544 = vld [vmem:[#allocation4 + $0xb8] sm:$0xff]
          %v1545 = vld [vmem:[#allocation4 + $0xc0] sm:$0xff]
          %v1546 = vld [vmem:[#allocation4 + $0xc8] sm:$0xff]
          %v1547 = vld [vmem:[#allocation4 + $0xd0] sm:$0xff]
          %v1548 = vld [vmem:[#allocation4 + $0xd8] sm:$0xff]
          %v1549 = vld [vmem:[#allocation4 + $0xe0] sm:$0xff]
          %v1550 = vld [vmem:[#allocation4 + $0xe8] sm:$0xff]
          %v1551 = vld [vmem:[#allocation4 + $0xf0] sm:$0xff]
          %v1552 = vld [vmem:[#allocation4 + $0xf8] sm:$0xff]
          %v1553 = vld [vmem:[%s3] sm:$0x1]
          %v1555 = vlaneseq
          %v1556 = vshrl.u32 %v1555, 7
          %v1557 = vsub.s32 0, %v1556
          %v1558 = vrot.slane %v1553, %v1557
          %v1560 = vadd.f32 %v1521, %v1558
          %v1561 = vadd.f32 %v1522, %v1558
          %v1562 = vadd.f32 %v1523, %v1558
          %v1563 = vadd.f32 %v1524, %v1558
          %v1564 = vadd.f32 %v1525, %v1558
          %v1565 = vadd.f32 %v1526, %v1558
          %v1566 = vadd.f32 %v1527, %v1558
          %v1567 = vadd.f32 %v1528, %v1558
          %v1568 = vadd.f32 %v1529, %v1558
          %v1569 = vadd.f32 %v1530, %v1558
          %v1570 = vadd.f32 %v1531, %v1558
          %v1571 = vadd.f32 %v1532, %v1558
          %v1572 = vadd.f32 %v1533, %v1558
          %v1573 = vadd.f32 %v1534, %v1558
          %v1574 = vadd.f32 %v1535, %v1558
          %v1575 = vadd.f32 %v1536, %v1558
          %v1576 = vadd.f32 %v1537, %v1558
          %v1577 = vadd.f32 %v1538, %v1558
          %v1578 = vadd.f32 %v1539, %v1558
          %v1579 = vadd.f32 %v1540, %v1558
          %v1580 = vadd.f32 %v1541, %v1558
          %v1581 = vadd.f32 %v1542, %v1558
          %v1582 = vadd.f32 %v1543, %v1558
          %v1583 = vadd.f32 %v1544, %v1558
          %v1584 = vadd.f32 %v1545, %v1558
          %v1585 = vadd.f32 %v1546, %v1558
          %v1586 = vadd.f32 %v1547, %v1558
          %v1587 = vadd.f32 %v1548, %v1558
          %v1588 = vadd.f32 %v1549, %v1558
          %v1589 = vadd.f32 %v1550, %v1558
          %v1590 = vadd.f32 %v1551, %v1558
          %v1591 = vadd.f32 %v1552, %v1558
          %v1592 = vmax.f32 %v1560, 0.0
          %v1593 = vmax.f32 %v1561, 0.0
          %v1594 = vmax.f32 %v1562, 0.0
          %v1595 = vmax.f32 %v1563, 0.0
          %v1596 = vmax.f32 %v1564, 0.0
          %v1597 = vmax.f32 %v1565, 0.0
          %v1598 = vmax.f32 %v1566, 0.0
          %v1599 = vmax.f32 %v1567, 0.0
          %v1600 = vmax.f32 %v1568, 0.0
          %v1601 = vmax.f32 %v1569, 0.0
          %v1602 = vmax.f32 %v1570, 0.0
          %v1603 = vmax.f32 %v1571, 0.0
          %v1604 = vmax.f32 %v1572, 0.0
          %v1605 = vmax.f32 %v1573, 0.0
          %v1606 = vmax.f32 %v1574, 0.0
          %v1607 = vmax.f32 %v1575, 0.0
          %v1608 = vmax.f32 %v1576, 0.0
          %v1609 = vmax.f32 %v1577, 0.0
          %v1610 = vmax.f32 %v1578, 0.0
          %v1611 = vmax.f32 %v1579, 0.0
          %v1612 = vmax.f32 %v1580, 0.0
          %v1613 = vmax.f32 %v1581, 0.0
          %v1614 = vmax.f32 %v1582, 0.0
          %v1615 = vmax.f32 %v1583, 0.0
          %v1616 = vmax.f32 %v1584, 0.0
          %v1617 = vmax.f32 %v1585, 0.0
          %v1618 = vmax.f32 %v1586, 0.0
          %v1619 = vmax.f32 %v1587, 0.0
          %v1620 = vmax.f32 %v1588, 0.0
          %v1621 = vmax.f32 %v1589, 0.0
          %v1622 = vmax.f32 %v1590, 0.0
          %v1623 = vmax.f32 %v1591, 0.0
          %v1624 = vpack.c.bf16 %v1593, %v1592
          %v1625 = vpack.c.bf16 %v1595, %v1594
          %v1626 = vpack.c.bf16 %v1597, %v1596
          %v1627 = vpack.c.bf16 %v1599, %v1598
          %v1628 = vpack.c.bf16 %v1601, %v1600
          %v1629 = vpack.c.bf16 %v1603, %v1602
          %v1630 = vpack.c.bf16 %v1605, %v1604
          %v1631 = vpack.c.bf16 %v1607, %v1606
          %v1632 = vpack.c.bf16 %v1609, %v1608
          %v1633 = vpack.c.bf16 %v1611, %v1610
          %v1634 = vpack.c.bf16 %v1613, %v1612
          %v1635 = vpack.c.bf16 %v1615, %v1614
          %v1636 = vpack.c.bf16 %v1617, %v1616
          %v1637 = vpack.c.bf16 %v1619, %v1618
          %v1638 = vpack.c.bf16 %v1621, %v1620
          %v1639 = vpack.c.bf16 %v1623, %v1622
          %s1640 = sshra.s32 %s317, 4
          %s1641 = sand.u32 %s317, 15
          %s1642 = smul.addr %s1640, 8
          %s1643 = scalar_lea.vmem [#allocation3], %s1642
          %1644 = vst [vmem:[%s1643] sm:$0xff] %v1624
          %1645 = vst [vmem:[%s1643 + $0x8] sm:$0xff] %v1625
          %1646 = vst [vmem:[%s1643 + $0x10] sm:$0xff] %v1626
          %1647 = vst [vmem:[%s1643 + $0x18] sm:$0xff] %v1627
          %1648 = vst [vmem:[%s1643 + $0x20] sm:$0xff] %v1628
          %1649 = vst [vmem:[%s1643 + $0x28] sm:$0xff] %v1629
          %1650 = vst [vmem:[%s1643 + $0x30] sm:$0xff] %v1630
          %1651 = vst [vmem:[%s1643 + $0x38] sm:$0xff] %v1631
          %1652 = vst [vmem:[%s1643 + $0x40] sm:$0xff] %v1632
          %1653 = vst [vmem:[%s1643 + $0x48] sm:$0xff] %v1633
          %1654 = vst [vmem:[%s1643 + $0x50] sm:$0xff] %v1634
          %1655 = vst [vmem:[%s1643 + $0x58] sm:$0xff] %v1635
          %1656 = vst [vmem:[%s1643 + $0x60] sm:$0xff] %v1636
          %1657 = vst [vmem:[%s1643 + $0x68] sm:$0xff] %v1637
          %1658 = vst [vmem:[%s1643 + $0x70] sm:$0xff] %v1638
          %1659 = vst [vmem:[%s1643 + $0x78] sm:$0xff] %v1639
        $region80: #{gcn_forward_padded.1} parent=43 // pred_fallthru
          _
        %p1660 = pnand %p758, %p1042
        %p1661 = pneg %p1660
        // Predicated region
        $region81: #{gcn_forward_padded.1} parent=43 // pred_check
          _
        $region82: #{gcn_forward_padded.1} parent=43 // pred_check_branch
          %1663 = sbr.rel (%p1660) target = $region84
        $region83: #{gcn_forward_padded.1} parent=43 // pred_region
          %1664 = vst [vmem:[#allocation5] sm:$0xff] 0.0
          %1665 = vst [vmem:[#allocation5 + $0x8] sm:$0xff] 0.0
          %1666 = vst [vmem:[#allocation5 + $0x10] sm:$0xff] 0.0
          %1667 = vst [vmem:[#allocation5 + $0x18] sm:$0xff] 0.0
          %1668 = vst [vmem:[#allocation5 + $0x20] sm:$0xff] 0.0
          %1669 = vst [vmem:[#allocation5 + $0x28] sm:$0xff] 0.0
          %1670 = vst [vmem:[#allocation5 + $0x30] sm:$0xff] 0.0
          %1671 = vst [vmem:[#allocation5 + $0x38] sm:$0xff] 0.0
          %1672 = vst [vmem:[#allocation5 + $0x40] sm:$0xff] 0.0
          %1673 = vst [vmem:[#allocation5 + $0x48] sm:$0xff] 0.0
          %1674 = vst [vmem:[#allocation5 + $0x50] sm:$0xff] 0.0
          %1675 = vst [vmem:[#allocation5 + $0x58] sm:$0xff] 0.0
          %1676 = vst [vmem:[#allocation5 + $0x60] sm:$0xff] 0.0
          %1677 = vst [vmem:[#allocation5 + $0x68] sm:$0xff] 0.0
          %1678 = vst [vmem:[#allocation5 + $0x70] sm:$0xff] 0.0
          %1679 = vst [vmem:[#allocation5 + $0x78] sm:$0xff] 0.0
          %1680 = vst [vmem:[#allocation5 + $0x80] sm:$0xff] 0.0
          %1681 = vst [vmem:[#allocation5 + $0x88] sm:$0xff] 0.0
          %1682 = vst [vmem:[#allocation5 + $0x90] sm:$0xff] 0.0
          %1683 = vst [vmem:[#allocation5 + $0x98] sm:$0xff] 0.0
          %1684 = vst [vmem:[#allocation5 + $0xa0] sm:$0xff] 0.0
          %1685 = vst [vmem:[#allocation5 + $0xa8] sm:$0xff] 0.0
          %1686 = vst [vmem:[#allocation5 + $0xb0] sm:$0xff] 0.0
          %1687 = vst [vmem:[#allocation5 + $0xb8] sm:$0xff] 0.0
          %1688 = vst [vmem:[#allocation5 + $0xc0] sm:$0xff] 0.0
          %1689 = vst [vmem:[#allocation5 + $0xc8] sm:$0xff] 0.0
          %1690 = vst [vmem:[#allocation5 + $0xd0] sm:$0xff] 0.0
          %1691 = vst [vmem:[#allocation5 + $0xd8] sm:$0xff] 0.0
          %1692 = vst [vmem:[#allocation5 + $0xe0] sm:$0xff] 0.0
          %1693 = vst [vmem:[#allocation5 + $0xe8] sm:$0xff] 0.0
          %1694 = vst [vmem:[#allocation5 + $0xf0] sm:$0xff] 0.0
          %1695 = vst [vmem:[#allocation5 + $0xf8] sm:$0xff] 0.0
        $region84: #{gcn_forward_padded.1} parent=43 // pred_fallthru
          _
        // Predicated region
        $region85: #{gcn_forward_padded.1} parent=43 // pred_check
          %p1696 = pneg %p758
        $region86: #{gcn_forward_padded.1} parent=43 // pred_check_branch
          %1698 = sbr.rel (%p1696) target = $region88
        $region87: #{gcn_forward_padded.1} parent=43 // pred_region
          %v1699 = vld [vmem:[#allocation5] sm:$0xff]
          %v1700 = vld [vmem:[#allocation5 + $0x8] sm:$0xff]
          %v1701 = vld [vmem:[#allocation5 + $0x10] sm:$0xff]
          %v1702 = vld [vmem:[#allocation5 + $0x18] sm:$0xff]
          %v1703 = vld [vmem:[#allocation5 + $0x20] sm:$0xff]
          %v1704 = vld [vmem:[#allocation5 + $0x28] sm:$0xff]
          %v1705 = vld [vmem:[#allocation5 + $0x30] sm:$0xff]
          %v1706 = vld [vmem:[#allocation5 + $0x38] sm:$0xff]
          %v1707 = vld [vmem:[#allocation5 + $0x40] sm:$0xff]
          %v1708 = vld [vmem:[#allocation5 + $0x48] sm:$0xff]
          %v1709 = vld [vmem:[#allocation5 + $0x50] sm:$0xff]
          %v1710 = vld [vmem:[#allocation5 + $0x58] sm:$0xff]
          %v1711 = vld [vmem:[#allocation5 + $0x60] sm:$0xff]
          %v1712 = vld [vmem:[#allocation5 + $0x68] sm:$0xff]
          %v1713 = vld [vmem:[#allocation5 + $0x70] sm:$0xff]
          %v1714 = vld [vmem:[#allocation5 + $0x78] sm:$0xff]
          %v1715 = vld [vmem:[#allocation5 + $0x80] sm:$0xff]
          %v1716 = vld [vmem:[#allocation5 + $0x88] sm:$0xff]
          %v1717 = vld [vmem:[#allocation5 + $0x90] sm:$0xff]
          %v1718 = vld [vmem:[#allocation5 + $0x98] sm:$0xff]
          %v1719 = vld [vmem:[#allocation5 + $0xa0] sm:$0xff]
          %v1720 = vld [vmem:[#allocation5 + $0xa8] sm:$0xff]
          %v1721 = vld [vmem:[#allocation5 + $0xb0] sm:$0xff]
          %v1722 = vld [vmem:[#allocation5 + $0xb8] sm:$0xff]
          %v1723 = vld [vmem:[#allocation5 + $0xc0] sm:$0xff]
          %v1724 = vld [vmem:[#allocation5 + $0xc8] sm:$0xff]
          %v1725 = vld [vmem:[#allocation5 + $0xd0] sm:$0xff]
          %v1726 = vld [vmem:[#allocation5 + $0xd8] sm:$0xff]
          %v1727 = vld [vmem:[#allocation5 + $0xe0] sm:$0xff]
          %v1728 = vld [vmem:[#allocation5 + $0xe8] sm:$0xff]
          %v1729 = vld [vmem:[#allocation5 + $0xf0] sm:$0xff]
          %v1730 = vld [vmem:[#allocation5 + $0xf8] sm:$0xff]
          %s1731 = sshra.s32 %s318, 4
          %s1732 = sand.u32 %s318, 15
          %s1733 = smul.addr %s1731, 8
          %s1734 = scalar_lea.vmem [#allocation2], %s1733
          %v1735 = vld [vmem:[%s1734] sm:$0xff]
          %v1736 = vld [vmem:[%s1734 + $0x8] sm:$0xff]
          %v1737 = vld [vmem:[%s1734 + $0x10] sm:$0xff]
          %v1738 = vld [vmem:[%s1734 + $0x18] sm:$0xff]
          %v1739 = vld [vmem:[%s1734 + $0x20] sm:$0xff]
          %v1740 = vld [vmem:[%s1734 + $0x28] sm:$0xff]
          %v1741 = vld [vmem:[%s1734 + $0x30] sm:$0xff]
          %v1742 = vld [vmem:[%s1734 + $0x38] sm:$0xff]
          %v1743 = vld [vmem:[%s1734 + $0x40] sm:$0xff]
          %v1744 = vld [vmem:[%s1734 + $0x48] sm:$0xff]
          %v1745 = vld [vmem:[%s1734 + $0x50] sm:$0xff]
          %v1746 = vld [vmem:[%s1734 + $0x58] sm:$0xff]
          %v1747 = vld [vmem:[%s1734 + $0x60] sm:$0xff]
          %v1748 = vld [vmem:[%s1734 + $0x68] sm:$0xff]
          %v1749 = vld [vmem:[%s1734 + $0x70] sm:$0xff]
          %v1750 = vld [vmem:[%s1734 + $0x78] sm:$0xff]
          %v1783 = vunpack.c.l.b16 %v327
          %v1784 = vunpack.c.h.b16 %v327
          %v1785 = vunpack.c.l.b16 %v328
          %v1786 = vunpack.c.h.b16 %v328
          %v1787 = vunpack.c.l.b16 %v329
          %v1788 = vunpack.c.h.b16 %v329
          %v1789 = vunpack.c.l.b16 %v330
          %v1790 = vunpack.c.h.b16 %v330
          %v1791 = vunpack.c.l.b16 %v331
          %v1792 = vunpack.c.h.b16 %v331
          %v1793 = vunpack.c.l.b16 %v332
          %v1794 = vunpack.c.h.b16 %v332
          %v1795 = vunpack.c.l.b16 %v333
          %v1796 = vunpack.c.h.b16 %v333
          %v1797 = vunpack.c.l.b16 %v334
          %v1798 = vunpack.c.h.b16 %v334
          %v1799 = vunpack.c.l.b16 %v335
          %v1800 = vunpack.c.h.b16 %v335
          %v1801 = vunpack.c.l.b16 %v336
          %v1802 = vunpack.c.h.b16 %v336
          %v1803 = vunpack.c.l.b16 %v337
          %v1804 = vunpack.c.h.b16 %v337
          %v1805 = vunpack.c.l.b16 %v338
          %v1806 = vunpack.c.h.b16 %v338
          %v1807 = vunpack.c.l.b16 %v339
          %v1808 = vunpack.c.h.b16 %v339
          %v1809 = vunpack.c.l.b16 %v340
          %v1810 = vunpack.c.h.b16 %v340
          %v1811 = vunpack.c.l.b16 %v341
          %v1812 = vunpack.c.h.b16 %v341
          %v1813 = vunpack.c.l.b16 %v342
          %v1814 = vunpack.c.h.b16 %v342
          %v1815 = vunpack.c.l.b16 %v343
          %v1816 = vunpack.c.h.b16 %v343
          %v1817 = vunpack.c.l.b16 %v344
          %v1818 = vunpack.c.h.b16 %v344
          %v1819 = vunpack.c.l.b16 %v345
          %v1820 = vunpack.c.h.b16 %v345
          %v1821 = vunpack.c.l.b16 %v346
          %v1822 = vunpack.c.h.b16 %v346
          %v1823 = vunpack.c.l.b16 %v347
          %v1824 = vunpack.c.h.b16 %v347
          %v1825 = vunpack.c.l.b16 %v348
          %v1826 = vunpack.c.h.b16 %v348
          %v1827 = vunpack.c.l.b16 %v349
          %v1828 = vunpack.c.h.b16 %v349
          %v1829 = vunpack.c.l.b16 %v350
          %v1830 = vunpack.c.h.b16 %v350
          %v1831 = vunpack.c.l.b16 %v351
          %v1832 = vunpack.c.h.b16 %v351
          %v1833 = vunpack.c.l.b16 %v352
          %v1834 = vunpack.c.h.b16 %v352
          %v1835 = vunpack.c.l.b16 %v353
          %v1836 = vunpack.c.h.b16 %v353
          %v1837 = vunpack.c.l.b16 %v354
          %v1838 = vunpack.c.h.b16 %v354
          %v1839 = vunpack.c.l.b16 %v355
          %v1840 = vunpack.c.h.b16 %v355
          %v1841 = vunpack.c.l.b16 %v356
          %v1842 = vunpack.c.h.b16 %v356
          %v1843 = vunpack.c.l.b16 %v357
          %v1844 = vunpack.c.h.b16 %v357
          %v1845 = vunpack.c.l.b16 %v358
          %v1846 = vunpack.c.h.b16 %v358
          %v1847 = vpack.c.b16 %v1785, %v1783
          %v1848 = vpack.c.b16 %v1786, %v1784
          %v1849 = vpack.c.b16 %v1789, %v1787
          %v1850 = vpack.c.b16 %v1790, %v1788
          %v1851 = vpack.c.b16 %v1793, %v1791
          %v1852 = vpack.c.b16 %v1794, %v1792
          %v1853 = vpack.c.b16 %v1797, %v1795
          %v1854 = vpack.c.b16 %v1798, %v1796
          %v1855 = vpack.c.b16 %v1801, %v1799
          %v1856 = vpack.c.b16 %v1802, %v1800
          %v1857 = vpack.c.b16 %v1805, %v1803
          %v1858 = vpack.c.b16 %v1806, %v1804
          %v1859 = vpack.c.b16 %v1809, %v1807
          %v1860 = vpack.c.b16 %v1810, %v1808
          %v1861 = vpack.c.b16 %v1813, %v1811
          %v1862 = vpack.c.b16 %v1814, %v1812
          %v1863 = vpack.c.b16 %v1817, %v1815
          %v1864 = vpack.c.b16 %v1818, %v1816
          %v1865 = vpack.c.b16 %v1821, %v1819
          %v1866 = vpack.c.b16 %v1822, %v1820
          %v1867 = vpack.c.b16 %v1825, %v1823
          %v1868 = vpack.c.b16 %v1826, %v1824
          %v1869 = vpack.c.b16 %v1829, %v1827
          %v1870 = vpack.c.b16 %v1830, %v1828
          %v1871 = vpack.c.b16 %v1833, %v1831
          %v1872 = vpack.c.b16 %v1834, %v1832
          %v1873 = vpack.c.b16 %v1837, %v1835
          %v1874 = vpack.c.b16 %v1838, %v1836
          %v1875 = vpack.c.b16 %v1841, %v1839
          %v1876 = vpack.c.b16 %v1842, %v1840
          %v1877 = vpack.c.b16 %v1845, %v1843
          %v1878 = vpack.c.b16 %v1846, %v1844
          %1911 = vmatprep.subr.bf16.mxu0 0
          %1912 = vmatpush1.bf16.msra.mxu0 %v1735
          %1913 = vmatprep.subr.bf16.mxu0 0
          %1914 = vmatpush1.bf16.msra.mxu0 %v1736
          %1915 = vmatprep.subr.bf16.mxu0 0
          %1916 = vmatpush1.bf16.msra.mxu0 %v1737
          %1917 = vmatprep.subr.bf16.mxu0 0
          %1918 = vmatpush1.bf16.msra.mxu0 %v1738
          %1919 = vmatprep.subr.bf16.mxu0 0
          %1920 = vmatpush1.bf16.msra.mxu0 %v1739
          %1921 = vmatprep.subr.bf16.mxu0 0
          %1922 = vmatpush1.bf16.msra.mxu0 %v1740
          %1923 = vmatprep.subr.bf16.mxu0 0
          %1924 = vmatpush1.bf16.msra.mxu0 %v1741
          %1925 = vmatprep.subr.bf16.mxu0 0
          %1926 = vmatpush1.bf16.msra.mxu0 %v1742
          %1927 = vmatprep.subr.bf16.mxu0 0
          %1928 = vmatpush1.bf16.msra.mxu0 %v1743
          %1929 = vmatprep.subr.bf16.mxu0 0
          %1930 = vmatpush1.bf16.msra.mxu0 %v1744
          %1931 = vmatprep.subr.bf16.mxu0 0
          %1932 = vmatpush1.bf16.msra.mxu0 %v1745
          %1933 = vmatprep.subr.bf16.mxu0 0
          %1934 = vmatpush1.bf16.msra.mxu0 %v1746
          %1935 = vmatprep.subr.bf16.mxu0 0
          %1936 = vmatpush1.bf16.msra.mxu0 %v1747
          %1937 = vmatprep.subr.bf16.mxu0 0
          %1938 = vmatpush1.bf16.msra.mxu0 %v1748
          %1939 = vmatprep.subr.bf16.mxu0 0
          %1940 = vmatpush1.bf16.msra.mxu0 %v1749
          %1941 = vmatprep.subr.bf16.mxu0 0
          %1942 = vmatpush1.bf16.msra.mxu0 %v1750
          %1943 = vmatprep.mubr.bf16.mxu0 %v1848
          %1944 = vmatmul.mubr.bf16.gmra.mrb[0].mxu0 %v1847
          %v1945 = vpop.f32.mrb[0].mxu0
          %v1946 = vadd.f32 0.0, %v1945
          %v1947 = vpop.f32.mrb[0].mxu0
          %v1948 = vpop.f32.mrb[0].mxu0
          %v1949 = vadd.f32 0.0, %v1948
          %v1950 = vpop.f32.mrb[0].mxu0
          %1951 = vmatprep.mubr.bf16.mxu0 %v1850
          %1952 = vmatmul.mubr.bf16.gmra.mrb[0].mxu0 %v1849
          %v1953 = vpop.f32.mrb[0].mxu0
          %v1954 = vadd.f32 0.0, %v1953
          %v1955 = vpop.f32.mrb[0].mxu0
          %v1956 = vpop.f32.mrb[0].mxu0
          %v1957 = vadd.f32 0.0, %v1956
          %v1958 = vpop.f32.mrb[0].mxu0
          %1959 = vmatprep.mubr.bf16.mxu0 %v1852
          %1960 = vmatmul.mubr.bf16.gmra.mrb[0].mxu0 %v1851
          %v1961 = vpop.f32.mrb[0].mxu0
          %v1962 = vadd.f32 0.0, %v1961
          %v1963 = vpop.f32.mrb[0].mxu0
          %v1964 = vpop.f32.mrb[0].mxu0
          %v1965 = vadd.f32 0.0, %v1964
          %v1966 = vpop.f32.mrb[0].mxu0
          %1967 = vmatprep.mubr.bf16.mxu0 %v1854
          %1968 = vmatmul.mubr.bf16.gmra.mrb[0].mxu0 %v1853
          %v1969 = vpop.f32.mrb[0].mxu0
          %v1970 = vadd.f32 0.0, %v1969
          %v1971 = vpop.f32.mrb[0].mxu0
          %v1972 = vpop.f32.mrb[0].mxu0
          %v1973 = vadd.f32 0.0, %v1972
          %v1974 = vpop.f32.mrb[0].mxu0
          %1975 = vmatprep.mubr.bf16.mxu0 %v1856
          %1976 = vmatmul.mubr.bf16.gmra.mrb[0].mxu0 %v1855
          %v1977 = vpop.f32.mrb[0].mxu0
          %v1978 = vadd.f32 0.0, %v1977
          %v1979 = vpop.f32.mrb[0].mxu0
          %v1980 = vpop.f32.mrb[0].mxu0
          %v1981 = vadd.f32 0.0, %v1980
          %v1982 = vpop.f32.mrb[0].mxu0
          %1983 = vmatprep.mubr.bf16.mxu0 %v1858
          %1984 = vmatmul.mubr.bf16.gmra.mrb[0].mxu0 %v1857
          %v1985 = vpop.f32.mrb[0].mxu0
          %v1986 = vadd.f32 0.0, %v1985
          %v1987 = vpop.f32.mrb[0].mxu0
          %v1988 = vpop.f32.mrb[0].mxu0
          %v1989 = vadd.f32 0.0, %v1988
          %v1990 = vpop.f32.mrb[0].mxu0
          %1991 = vmatprep.mubr.bf16.mxu0 %v1860
          %1992 = vmatmul.mubr.bf16.gmra.mrb[0].mxu0 %v1859
          %v1993 = vpop.f32.mrb[0].mxu0
          %v1994 = vadd.f32 0.0, %v1993
          %v1995 = vpop.f32.mrb[0].mxu0
          %v1996 = vpop.f32.mrb[0].mxu0
          %v1997 = vadd.f32 0.0, %v1996
          %v1998 = vpop.f32.mrb[0].mxu0
          %1999 = vmatprep.mubr.bf16.mxu0 %v1862
          %2000 = vmatmul.mubr.bf16.gmra.mrb[0].mxu0 %v1861
          %v2001 = vpop.f32.mrb[0].mxu0
          %v2002 = vadd.f32 0.0, %v2001
          %v2003 = vpop.f32.mrb[0].mxu0
          %v2004 = vpop.f32.mrb[0].mxu0
          %v2005 = vadd.f32 0.0, %v2004
          %v2006 = vpop.f32.mrb[0].mxu0
          %2007 = vmatprep.mubr.bf16.mxu0 %v1864
          %2008 = vmatmul.mubr.bf16.gmra.mrb[0].mxu0 %v1863
          %v2009 = vpop.f32.mrb[0].mxu0
          %v2010 = vadd.f32 0.0, %v2009
          %v2011 = vpop.f32.mrb[0].mxu0
          %v2012 = vpop.f32.mrb[0].mxu0
          %v2013 = vadd.f32 0.0, %v2012
          %v2014 = vpop.f32.mrb[0].mxu0
          %2015 = vmatprep.mubr.bf16.mxu0 %v1866
          %2016 = vmatmul.mubr.bf16.gmra.mrb[0].mxu0 %v1865
          %v2017 = vpop.f32.mrb[0].mxu0
          %v2018 = vadd.f32 0.0, %v2017
          %v2019 = vpop.f32.mrb[0].mxu0
          %v2020 = vpop.f32.mrb[0].mxu0
          %v2021 = vadd.f32 0.0, %v2020
          %v2022 = vpop.f32.mrb[0].mxu0
          %2023 = vmatprep.mubr.bf16.mxu0 %v1868
          %2024 = vmatmul.mubr.bf16.gmra.mrb[0].mxu0 %v1867
          %v2025 = vpop.f32.mrb[0].mxu0
          %v2026 = vadd.f32 0.0, %v2025
          %v2027 = vpop.f32.mrb[0].mxu0
          %v2028 = vpop.f32.mrb[0].mxu0
          %v2029 = vadd.f32 0.0, %v2028
          %v2030 = vpop.f32.mrb[0].mxu0
          %2031 = vmatprep.mubr.bf16.mxu0 %v1870
          %2032 = vmatmul.mubr.bf16.gmra.mrb[0].mxu0 %v1869
          %v2033 = vpop.f32.mrb[0].mxu0
          %v2034 = vadd.f32 0.0, %v2033
          %v2035 = vpop.f32.mrb[0].mxu0
          %v2036 = vpop.f32.mrb[0].mxu0
          %v2037 = vadd.f32 0.0, %v2036
          %v2038 = vpop.f32.mrb[0].mxu0
          %2039 = vmatprep.mubr.bf16.mxu0 %v1872
          %2040 = vmatmul.mubr.bf16.gmra.mrb[0].mxu0 %v1871
          %v2041 = vpop.f32.mrb[0].mxu0
          %v2042 = vadd.f32 0.0, %v2041
          %v2043 = vpop.f32.mrb[0].mxu0
          %v2044 = vpop.f32.mrb[0].mxu0
          %v2045 = vadd.f32 0.0, %v2044
          %v2046 = vpop.f32.mrb[0].mxu0
          %2047 = vmatprep.mubr.bf16.mxu0 %v1874
          %2048 = vmatmul.mubr.bf16.gmra.mrb[0].mxu0 %v1873
          %v2049 = vpop.f32.mrb[0].mxu0
          %v2050 = vadd.f32 0.0, %v2049
          %v2051 = vpop.f32.mrb[0].mxu0
          %v2052 = vpop.f32.mrb[0].mxu0
          %v2053 = vadd.f32 0.0, %v2052
          %v2054 = vpop.f32.mrb[0].mxu0
          %2055 = vmatprep.mubr.bf16.mxu0 %v1876
          %2056 = vmatmul.mubr.bf16.gmra.mrb[0].mxu0 %v1875
          %v2057 = vpop.f32.mrb[0].mxu0
          %v2058 = vadd.f32 0.0, %v2057
          %v2059 = vpop.f32.mrb[0].mxu0
          %v2060 = vpop.f32.mrb[0].mxu0
          %v2061 = vadd.f32 0.0, %v2060
          %v2062 = vpop.f32.mrb[0].mxu0
          %2063 = vmatprep.mubr.bf16.mxu0 %v1878
          %2064 = vmatmul.mubr.bf16.gmra.mrb[0].mxu0 %v1877
          %v2065 = vpop.f32.mrb[0].mxu0
          %v2066 = vadd.f32 0.0, %v2065
          %v2067 = vpop.f32.mrb[0].mxu0
          %v2068 = vpop.f32.mrb[0].mxu0
          %v2069 = vadd.f32 0.0, %v2068
          %v2070 = vpop.f32.mrb[0].mxu0
          %2071 = vdwg.mxu0
          %v2072 = vadd.f32 %v1699, %v1946
          %v2073 = vadd.f32 %v1700, %v1949
          %v2074 = vadd.f32 %v1701, %v1954
          %v2075 = vadd.f32 %v1702, %v1957
          %v2076 = vadd.f32 %v1703, %v1962
          %v2077 = vadd.f32 %v1704, %v1965
          %v2078 = vadd.f32 %v1705, %v1970
          %v2079 = vadd.f32 %v1706, %v1973
          %v2080 = vadd.f32 %v1707, %v1978
          %v2081 = vadd.f32 %v1708, %v1981
          %v2082 = vadd.f32 %v1709, %v1986
          %v2083 = vadd.f32 %v1710, %v1989
          %v2084 = vadd.f32 %v1711, %v1994
          %v2085 = vadd.f32 %v1712, %v1997
          %v2086 = vadd.f32 %v1713, %v2002
          %v2087 = vadd.f32 %v1714, %v2005
          %v2088 = vadd.f32 %v1715, %v2010
          %v2089 = vadd.f32 %v1716, %v2013
          %v2090 = vadd.f32 %v1717, %v2018
          %v2091 = vadd.f32 %v1718, %v2021
          %v2092 = vadd.f32 %v1719, %v2026
          %v2093 = vadd.f32 %v1720, %v2029
          %v2094 = vadd.f32 %v1721, %v2034
          %v2095 = vadd.f32 %v1722, %v2037
          %v2096 = vadd.f32 %v1723, %v2042
          %v2097 = vadd.f32 %v1724, %v2045
          %v2098 = vadd.f32 %v1725, %v2050
          %v2099 = vadd.f32 %v1726, %v2053
          %v2100 = vadd.f32 %v1727, %v2058
          %v2101 = vadd.f32 %v1728, %v2061
          %v2102 = vadd.f32 %v1729, %v2066
          %v2103 = vadd.f32 %v1730, %v2069
          %2104 = vst [vmem:[#allocation5] sm:$0xff] %v2072
          %2105 = vst [vmem:[#allocation5 + $0x8] sm:$0xff] %v2073
          %2106 = vst [vmem:[#allocation5 + $0x10] sm:$0xff] %v2074
          %2107 = vst [vmem:[#allocation5 + $0x18] sm:$0xff] %v2075
          %2108 = vst [vmem:[#allocation5 + $0x20] sm:$0xff] %v2076
          %2109 = vst [vmem:[#allocation5 + $0x28] sm:$0xff] %v2077
          %2110 = vst [vmem:[#allocation5 + $0x30] sm:$0xff] %v2078
          %2111 = vst [vmem:[#allocation5 + $0x38] sm:$0xff] %v2079
          %2112 = vst [vmem:[#allocation5 + $0x40] sm:$0xff] %v2080
          %2113 = vst [vmem:[#allocation5 + $0x48] sm:$0xff] %v2081
          %2114 = vst [vmem:[#allocation5 + $0x50] sm:$0xff] %v2082
          %2115 = vst [vmem:[#allocation5 + $0x58] sm:$0xff] %v2083
          %2116 = vst [vmem:[#allocation5 + $0x60] sm:$0xff] %v2084
          %2117 = vst [vmem:[#allocation5 + $0x68] sm:$0xff] %v2085
          %2118 = vst [vmem:[#allocation5 + $0x70] sm:$0xff] %v2086
          %2119 = vst [vmem:[#allocation5 + $0x78] sm:$0xff] %v2087
          %2120 = vst [vmem:[#allocation5 + $0x80] sm:$0xff] %v2088
          %2121 = vst [vmem:[#allocation5 + $0x88] sm:$0xff] %v2089
          %2122 = vst [vmem:[#allocation5 + $0x90] sm:$0xff] %v2090
          %2123 = vst [vmem:[#allocation5 + $0x98] sm:$0xff] %v2091
          %2124 = vst [vmem:[#allocation5 + $0xa0] sm:$0xff] %v2092
          %2125 = vst [vmem:[#allocation5 + $0xa8] sm:$0xff] %v2093
          %2126 = vst [vmem:[#allocation5 + $0xb0] sm:$0xff] %v2094
          %2127 = vst [vmem:[#allocation5 + $0xb8] sm:$0xff] %v2095
          %2128 = vst [vmem:[#allocation5 + $0xc0] sm:$0xff] %v2096
          %2129 = vst [vmem:[#allocation5 + $0xc8] sm:$0xff] %v2097
          %2130 = vst [vmem:[#allocation5 + $0xd0] sm:$0xff] %v2098
          %2131 = vst [vmem:[#allocation5 + $0xd8] sm:$0xff] %v2099
          %2132 = vst [vmem:[#allocation5 + $0xe0] sm:$0xff] %v2100
          %2133 = vst [vmem:[#allocation5 + $0xe8] sm:$0xff] %v2101
          %2134 = vst [vmem:[#allocation5 + $0xf0] sm:$0xff] %v2102
          %2135 = vst [vmem:[#allocation5 + $0xf8] sm:$0xff] %v2103
        $region88: #{gcn_forward_padded.1} parent=43 // pred_fallthru
          _
        // Predicated region
        $region89: #{gcn_forward_padded.1} parent=43 // pred_check
          _
        $region90: #{gcn_forward_padded.1} parent=43 // pred_check_branch
          %2137 = sbr.rel (%p1660) target = $region92
        $region91: #{gcn_forward_padded.1} parent=43 // pred_region
          %v2138 = vld [vmem:[#allocation5] sm:$0xff]
          %v2139 = vld [vmem:[#allocation5 + $0x8] sm:$0xff]
          %v2140 = vld [vmem:[#allocation5 + $0x10] sm:$0xff]
          %v2141 = vld [vmem:[#allocation5 + $0x18] sm:$0xff]
          %v2142 = vld [vmem:[#allocation5 + $0x20] sm:$0xff]
          %v2143 = vld [vmem:[#allocation5 + $0x28] sm:$0xff]
          %v2144 = vld [vmem:[#allocation5 + $0x30] sm:$0xff]
          %v2145 = vld [vmem:[#allocation5 + $0x38] sm:$0xff]
          %v2146 = vld [vmem:[#allocation5 + $0x40] sm:$0xff]
          %v2147 = vld [vmem:[#allocation5 + $0x48] sm:$0xff]
          %v2148 = vld [vmem:[#allocation5 + $0x50] sm:$0xff]
          %v2149 = vld [vmem:[#allocation5 + $0x58] sm:$0xff]
          %v2150 = vld [vmem:[#allocation5 + $0x60] sm:$0xff]
          %v2151 = vld [vmem:[#allocation5 + $0x68] sm:$0xff]
          %v2152 = vld [vmem:[#allocation5 + $0x70] sm:$0xff]
          %v2153 = vld [vmem:[#allocation5 + $0x78] sm:$0xff]
          %v2154 = vld [vmem:[#allocation5 + $0x80] sm:$0xff]
          %v2155 = vld [vmem:[#allocation5 + $0x88] sm:$0xff]
          %v2156 = vld [vmem:[#allocation5 + $0x90] sm:$0xff]
          %v2157 = vld [vmem:[#allocation5 + $0x98] sm:$0xff]
          %v2158 = vld [vmem:[#allocation5 + $0xa0] sm:$0xff]
          %v2159 = vld [vmem:[#allocation5 + $0xa8] sm:$0xff]
          %v2160 = vld [vmem:[#allocation5 + $0xb0] sm:$0xff]
          %v2161 = vld [vmem:[#allocation5 + $0xb8] sm:$0xff]
          %v2162 = vld [vmem:[#allocation5 + $0xc0] sm:$0xff]
          %v2163 = vld [vmem:[#allocation5 + $0xc8] sm:$0xff]
          %v2164 = vld [vmem:[#allocation5 + $0xd0] sm:$0xff]
          %v2165 = vld [vmem:[#allocation5 + $0xd8] sm:$0xff]
          %v2166 = vld [vmem:[#allocation5 + $0xe0] sm:$0xff]
          %v2167 = vld [vmem:[#allocation5 + $0xe8] sm:$0xff]
          %v2168 = vld [vmem:[#allocation5 + $0xf0] sm:$0xff]
          %v2169 = vld [vmem:[#allocation5 + $0xf8] sm:$0xff]
          %v2170 = vld [vmem:[%s5] sm:$0x1]
          %v2172 = vlaneseq
          %v2173 = vshrl.u32 %v2172, 7
          %v2174 = vsub.s32 0, %v2173
          %v2175 = vrot.slane %v2170, %v2174
          %v2177 = vadd.f32 %v2138, %v2175
          %v2178 = vadd.f32 %v2139, %v2175
          %v2179 = vadd.f32 %v2140, %v2175
          %v2180 = vadd.f32 %v2141, %v2175
          %v2181 = vadd.f32 %v2142, %v2175
          %v2182 = vadd.f32 %v2143, %v2175
          %v2183 = vadd.f32 %v2144, %v2175
          %v2184 = vadd.f32 %v2145, %v2175
          %v2185 = vadd.f32 %v2146, %v2175
          %v2186 = vadd.f32 %v2147, %v2175
          %v2187 = vadd.f32 %v2148, %v2175
          %v2188 = vadd.f32 %v2149, %v2175
          %v2189 = vadd.f32 %v2150, %v2175
          %v2190 = vadd.f32 %v2151, %v2175
          %v2191 = vadd.f32 %v2152, %v2175
          %v2192 = vadd.f32 %v2153, %v2175
          %v2193 = vadd.f32 %v2154, %v2175
          %v2194 = vadd.f32 %v2155, %v2175
          %v2195 = vadd.f32 %v2156, %v2175
          %v2196 = vadd.f32 %v2157, %v2175
          %v2197 = vadd.f32 %v2158, %v2175
          %v2198 = vadd.f32 %v2159, %v2175
          %v2199 = vadd.f32 %v2160, %v2175
          %v2200 = vadd.f32 %v2161, %v2175
          %v2201 = vadd.f32 %v2162, %v2175
          %v2202 = vadd.f32 %v2163, %v2175
          %v2203 = vadd.f32 %v2164, %v2175
          %v2204 = vadd.f32 %v2165, %v2175
          %v2205 = vadd.f32 %v2166, %v2175
          %v2206 = vadd.f32 %v2167, %v2175
          %v2207 = vadd.f32 %v2168, %v2175
          %v2208 = vadd.f32 %v2169, %v2175
          %2209 = vst [vmem:[%s313] sm:$0xff] %v2177
          %2210 = vst [vmem:[%s313 + $0x8] sm:$0xff] %v2178
          %2211 = vst [vmem:[%s313 + $0x10] sm:$0xff] %v2179
          %2212 = vst [vmem:[%s313 + $0x18] sm:$0xff] %v2180
          %2213 = vst [vmem:[%s313 + $0x20] sm:$0xff] %v2181
          %2214 = vst [vmem:[%s313 + $0x28] sm:$0xff] %v2182
          %2215 = vst [vmem:[%s313 + $0x30] sm:$0xff] %v2183
          %2216 = vst [vmem:[%s313 + $0x38] sm:$0xff] %v2184
          %2217 = vst [vmem:[%s313 + $0x40] sm:$0xff] %v2185
          %2218 = vst [vmem:[%s313 + $0x48] sm:$0xff] %v2186
          %2219 = vst [vmem:[%s313 + $0x50] sm:$0xff] %v2187
          %2220 = vst [vmem:[%s313 + $0x58] sm:$0xff] %v2188
          %2221 = vst [vmem:[%s313 + $0x60] sm:$0xff] %v2189
          %2222 = vst [vmem:[%s313 + $0x68] sm:$0xff] %v2190
          %2223 = vst [vmem:[%s313 + $0x70] sm:$0xff] %v2191
          %2224 = vst [vmem:[%s313 + $0x78] sm:$0xff] %v2192
          %2225 = vst [vmem:[%s313 + $0x80] sm:$0xff] %v2193
          %2226 = vst [vmem:[%s313 + $0x88] sm:$0xff] %v2194
          %2227 = vst [vmem:[%s313 + $0x90] sm:$0xff] %v2195
          %2228 = vst [vmem:[%s313 + $0x98] sm:$0xff] %v2196
          %2229 = vst [vmem:[%s313 + $0xa0] sm:$0xff] %v2197
          %2230 = vst [vmem:[%s313 + $0xa8] sm:$0xff] %v2198
          %2231 = vst [vmem:[%s313 + $0xb0] sm:$0xff] %v2199
          %2232 = vst [vmem:[%s313 + $0xb8] sm:$0xff] %v2200
          %2233 = vst [vmem:[%s313 + $0xc0] sm:$0xff] %v2201
          %2234 = vst [vmem:[%s313 + $0xc8] sm:$0xff] %v2202
          %2235 = vst [vmem:[%s313 + $0xd0] sm:$0xff] %v2203
          %2236 = vst [vmem:[%s313 + $0xd8] sm:$0xff] %v2204
          %2237 = vst [vmem:[%s313 + $0xe0] sm:$0xff] %v2205
          %2238 = vst [vmem:[%s313 + $0xe8] sm:$0xff] %v2206
          %2239 = vst [vmem:[%s313 + $0xf0] sm:$0xff] %v2207
          %2240 = vst [vmem:[%s313 + $0xf8] sm:$0xff] %v2208
        $region92: #{gcn_forward_padded.1} parent=43 // pred_fallthru
          _
        %s2241 = smul.u32 %s26, %s25
        %s2242 = smul.u32 32, %s2241
        %p2243 = scmp.lt.s32.totalorder %s2242, 31
        %s2244 = scalar_select %p2243, %s2242, 31
        %s2245 = smul.addr %s2244, 8
        %s2246 = scalar_lea.vmem %s6, %s2245
        // Predicated region
        $region93: #{gcn_forward_padded.1} parent=43 // pred_check
          %p2247 = pneg %p185
        $region94: #{gcn_forward_padded.1} parent=43 // pred_check_branch
          %2249 = sbr.rel (%p2247) target = $region96
        $region95: #{gcn_forward_padded.1} parent=43 // pred_region
          %s2250 = smul.u32 %s26, %s25
          %s2251 = smul.u32 32, %s2250
        $region96: #{gcn_forward_padded.1} parent=43 // pred_fallthru
          _
      $region44: #{gcn_forward_padded.1} parent=5 // pred_fallthru
        _
      %p2252 = scmp.le.s32.totalorder 2, %s15
      // Predicated region
      $region97: #{gcn_forward_padded.1} parent=5 // pred_check
        %p2253 = pneg %p2252
      $region98: #{gcn_forward_padded.1} parent=5 // pred_check_branch
        %2255 = sbr.rel (%p2253) target = $region100
      $region99: #{gcn_forward_padded.1} parent=5 // pred_region
        %s2256 = ssub.s32 %s15, 2
        // Predicated region
        $region101: #{gcn_forward_padded.1} parent=99 // pred_check
          %p2257 = pneg %p191
        $region102: #{gcn_forward_padded.1} parent=99 // pred_check_branch
          %2259 = sbr.rel (%p2257) target = $region104
        $region103: #{gcn_forward_padded.1} parent=99 // pred_region
          %s2260 = smul.u32 %s29, %s28
          %s2261 = smul.u32 32, %s2260
          %p2262 = scmp.lt.s32.totalorder %s2261, 31
          %s2263 = scalar_select %p2262, %s2261, 31
          %s2264 = smul.addr %s2263, 8
          %s2265 = scalar_lea.vmem %s6, %s2264
        $region104: #{gcn_forward_padded.1} parent=99 // pred_fallthru
          _
      $region100: #{gcn_forward_padded.1} parent=5 // pred_fallthru
        _
    $region6: #{gcn_forward_padded.1} parent=1 // loop_footer
      %s19 = sadd.s32 1, %s15
    $region7: #{gcn_forward_padded.1} parent=1 // loop_footer_branch
      %14 = sbr.rel target = $region3
    $region8: #{gcn_forward_padded.1} parent=1 // loop_exit
      _
    %2266 = vsyncpa [#allocation7], 1
    %s2267 = scalar_lea.sflag [#allocation7], 1
    %2268 = vsyncpa %s2267, 1
    %2269 = vsyncpa [#allocation9], 1
    %2270 = vsyncpa [#allocation12], 1

</llo_original>
